<compile_context>
chip_gen: v5e
topology: v5e:2x2
jax: 0.10.0
libtpu: 0.0.40
codegen_flags: <defaults>
</compile_context>

<pallas_src>
import jax
import jax.numpy as jnp
from jax.experimental import pallas as pl
from jax.experimental.pallas import tpu as pltpu


# ----------------------------- fused Pallas kernel -----------------------------

def _bottleneck_kernel(x_ref, w1_ref, g1_ref, b1_ref,
                       sh3_ref, w2_ref, g2_ref, b2_ref,
                       w3_ref, g3_ref, b3_ref,
                       caw1_ref, cab1_ref, caw2_ref, cab2_ref,
                       amean_ref, amax_ref, sab_ref,
                       o_ref):
    # x:(1,H,W,Cin)  w1:(Cin,width)  sh3:(9,HW,HW)  w2:(9,width,width)  w3:(width,Cout)
    # caw1:(Cout,Cr) caw2:(Cr,Cout)  amean/amax:(HW,HW)  sab:(1,1)  o:(1,H,W,Cout)
    _, H, W, Cin = x_ref.shape
    width = w1_ref.shape[1]
    Cout = w3_ref.shape[1]
    HW = H * W

    # identity / conv1 input; (H,W,C)->(HW,C) reshape is layout-preserving.
    x2 = x_ref[0].reshape(HW, Cin)                                    # (HW, Cin)

    # ---- conv1 (1x1) + bn1 + relu ----
    h1 = jnp.dot(x2, w1_ref[...], preferred_element_type=jnp.float32)
    h1 = jnp.maximum(h1 * g1_ref[...] + b1_ref[...], 0.0)            # (HW, width)

    # ---- conv2 (3x3, pad=1) + bn2 + relu : sum_k S_k @ (h1 @ W2_k) ----
    h2 = jnp.zeros((HW, width), jnp.float32)
    for k in range(9):
        t = jnp.dot(h1, w2_ref[k], preferred_element_type=jnp.float32)      # (HW, width)
        h2 = h2 + jnp.dot(sh3_ref[k], t, preferred_element_type=jnp.float32)
    h2 = jnp.maximum(h2 * g2_ref[...] + b2_ref[...], 0.0)            # (HW, width)

    # ---- conv3 (1x1) + bn3 ----
    y = jnp.dot(h2, w3_ref[...], preferred_element_type=jnp.float32)
    y = y * g3_ref[...] + b3_ref[...]                                # (HW, Cout)

    # ---- channel attention: avg & max pool over H*W -> shared 2-layer MLP ----
    avg = jnp.mean(y, axis=0, keepdims=True)                         # (1, Cout)
    mx = jnp.max(y, axis=0, keepdims=True)                           # (1, Cout)
    pooled = jnp.concatenate([avg, mx], axis=0)                      # (2, Cout)
    hmid = jnp.maximum(
        jnp.dot(pooled, caw1_ref[...], preferred_element_type=jnp.float32) + cab1_ref[...],
        0.0)                                                         # (2, Cr)
    z = jnp.dot(hmid, caw2_ref[...], preferred_element_type=jnp.float32) + cab2_ref[...]
    ca = jax.nn.sigmoid(jnp.sum(z, axis=0, keepdims=True))           # (1, Cout)
    y_ca = y * ca                                                    # (HW, Cout)

    # ---- spatial attention: 7x7 conv over [mean_c, max_c] via precomputed matrices ----
    mean_b = jnp.broadcast_to(jnp.mean(y_ca, axis=1, keepdims=True), (HW, Cout))
    max_b = jnp.broadcast_to(jnp.max(y_ca, axis=1, keepdims=True), (HW, Cout))
    sa = jax.nn.sigmoid(
        jnp.dot(amean_ref[...], mean_b, preferred_element_type=jnp.float32)
        + jnp.dot(amax_ref[...], max_b, preferred_element_type=jnp.float32)
        + sab_ref[...])                                              # (HW, Cout)

    # ---- fuse: relu(y_ca * sa + identity) ----
    out = jnp.maximum(y_ca * sa + x2, 0.0)                           # (HW, Cout)
    o_ref[...] = out.reshape(1, H, W, Cout).astype(o_ref.dtype)


# ----------------------------- wrapper -----------------------------

def bottleneck_forward(x_nchw, p):
    x = jnp.transpose(x_nchw, (0, 2, 3, 1)).astype(jnp.float32)      # NHWC
    N, H, W, Cin = x.shape
    width = p['w1'].shape[1]
    Cout = p['w3'].shape[1]
    Cr = p['ca_w1'].shape[1]
    HW = H * W
    assert Cin == Cout, "identity path requires inplanes == planes*4 (downsample=None)"

    g1, b1 = p['bn1']
    g2, b2 = p['bn2']
    g3, b3 = p['bn3']

    # ----- host-precomputed spatial shift matrices -----
    idx = jnp.arange(HW)
    yi, xi = idx // W, idx % W

    def shift_mat(dy, dx):
        # S[i, j] = 1 iff pixel j == pixel i shifted by (dy, dx), zero-padded at borders.
        yj, xj = yi + dy, xi + dx
        valid = (yj >= 0) & (yj < H) & (xj >= 0) & (xj < W)
        tgt = yj * W + xj
        return (valid[:, None] & (idx[None, :] == tgt[:, None])).astype(jnp.float32)

    # 3x3 conv shifts (pad=1), k = dy*3 + dx matching w2.reshape(9, width, width).
    shifts3 = jnp.stack([shift_mat(dy - 1, dx - 1)
                         for dy in range(3) for dx in range(3)])      # (9, HW, HW)
    w2mat = p['w2'].reshape(9, width, width)

    # 7x7 spatial-attention conv (pad=3): fold weights into two (HW, HW) matrices.
    shifts7 = jnp.stack([shift_mat(dy - 3, dx - 3)
                         for dy in range(7) for dx in range(7)])      # (49, HW, HW)
    a_mats = jnp.einsum('kij,kc->cij', shifts7, p['sa_w'].reshape(49, 2))
    a_mean, a_max = a_mats[0], a_mats[1]                              # (HW, HW) each
    sab = p['sa_b'].reshape(1, 1)

    def _const(shape):
        r = len(shape)
        return pl.BlockSpec(shape, lambda n, r=r: (0,) * r)

    out = pl.pallas_call(
        _bottleneck_kernel,
        out_shape=jax.ShapeDtypeStruct((N, H, W, Cout), jnp.float32),
        grid=(N,),
        in_specs=[
            pl.BlockSpec((1, H, W, Cin), lambda n: (n, 0, 0, 0)),
            _const((Cin, width)), _const((1, width)), _const((1, width)),
            _const((9, HW, HW)), _const((9, width, width)),
            _const((1, width)), _const((1, width)),
            _const((width, Cout)), _const((1, Cout)), _const((1, Cout)),
            _const((Cout, Cr)), _const((1, Cr)), _const((Cr, Cout)), _const((1, Cout)),
            _const((HW, HW)), _const((HW, HW)), _const((1, 1)),
        ],
        out_specs=pl.BlockSpec((1, H, W, Cout), lambda n: (n, 0, 0, 0)),
        compiler_params=pltpu.CompilerParams(
            dimension_semantics=("parallel",),
            vmem_limit_bytes=32 * 1024 * 1024,
        ),
    )(x, p['w1'], g1.reshape(1, width), b1.reshape(1, width),
      shifts3, w2mat, g2.reshape(1, width), b2.reshape(1, width),
      p['w3'], g3.reshape(1, Cout), b3.reshape(1, Cout),
      p['ca_w1'], p['ca_b1'].reshape(1, Cr), p['ca_w2'], p['ca_b2'].reshape(1, Cout),
      a_mean, a_max, sab)

    return jnp.transpose(out, (0, 3, 1, 2))                          # back to NCHW


# ----------------------------- parameters -----------------------------

def init_params(key, inplanes, planes, reduction=16):
    width = planes                 # base_width=64, groups=1
    cout = planes * 4              # Bottleneck.expansion = 4
    cr = cout // reduction
    ks = jax.random.split(key, 12)

    def nrm(k, shape, scale=0.1):
        return (scale * jax.random.normal(k, shape)).astype(jnp.float32)

    def bn_fold(k, c, eps=1e-5):
        k1, k2, k3, k4 = jax.random.split(k, 4)
        gamma = 1.0 + 0.1 * jax.random.normal(k1, (c,))
        beta = 0.1 * jax.random.normal(k2, (c,))
        mean = 0.1 * jax.random.normal(k3, (c,))
        var = jnp.abs(jax.random.normal(k4, (c,))) + 0.5
        scale = gamma / jnp.sqrt(var + eps)
        bias = beta - mean * scale
        return scale.astype(jnp.float32), bias.astype(jnp.float32)

    return dict(
        w1=nrm(ks[0], (inplanes, width)),          # conv1 1x1, (Cin, Cout)
        bn1=bn_fold(ks[1], width),
        w2=nrm(ks[2], (3, 3, width, width)),       # conv2 3x3, (kh, kw, Cin, Cout)
        bn2=bn_fold(ks[3], width),
        w3=nrm(ks[4], (width, cout)),              # conv3 1x1
        bn3=bn_fold(ks[5], cout),
        ca_w1=nrm(ks[6], (cout, cr)), ca_b1=nrm(ks[7], (cr,)),
        ca_w2=nrm(ks[8], (cr, cout)), ca_b2=nrm(ks[9], (cout,)),
        sa_w=nrm(ks[10], (7, 7, 2)), sa_b=nrm(ks[11], (1,)),
    )


# ----------------------------- pure-JAX reference -----------------------------

def bottleneck_reference(x_nchw, p):
    P = jax.lax.Precision.HIGHEST
    x = jnp.transpose(x_nchw, (0, 2, 3, 1)).astype(jnp.float32)

    def pw(v, w, s, b, relu):
        y = jnp.einsum('nhwc,cd->nhwd', v, w, precision=P) * s + b
        return jnp.maximum(y, 0.0) if relu else y

    def c3(v, w, s, b):
        H, W = v.shape[1], v.shape[2]
        vp = jnp.pad(v, ((0, 0), (1, 1), (1, 1), (0, 0)))
        acc = 0.0
        for dy in range(3):
            for dx in range(3):
                acc = acc + jnp.einsum('nhwc,cd->nhwd',
                                       vp[:, dy:dy + H, dx:dx + W, :], w[dy, dx],
                                       precision=P)
        return jnp.maximum(acc * s + b, 0.0)

    y = pw(x, p['w1'], p['bn1'][0], p['bn1'][1], True)
    y = c3(y, p['w2'], p['bn2'][0], p['bn2'][1])
    y = pw(y, p['w3'], p['bn3'][0], p['bn3'][1], False)

    avg = jnp.mean(y, axis=(1, 2), keepdims=True)
    mx = jnp.max(y, axis=(1, 2), keepdims=True)

    def mlp(v):
        h = jnp.maximum(jnp.einsum('nhwc,cd->nhwd', v, p['ca_w1'], precision=P) + p['ca_b1'], 0.0)
        return jnp.einsum('nhwc,cd->nhwd', h, p['ca_w2'], precision=P) + p['ca_b2']

    ca = jax.nn.sigmoid(mlp(avg) + mlp(mx))
    y = ca * y

    pool = jnp.concatenate([jnp.mean(y, axis=3, keepdims=True),
                            jnp.max(y, axis=3, keepdims=True)], axis=3)
    pp = jnp.pad(pool, ((0, 0), (3, 3), (3, 3), (0, 0)))
    H, W = y.shape[1], y.shape[2]
    acc = jnp.zeros((y.shape[0], H, W, 1), jnp.float32) + p['sa_b'][0]
    for dy in range(7):
        for dx in range(7):
            for c in range(2):
                acc = acc + pp[:, dy:dy + H, dx:dx + W, c:c + 1] * p['sa_w'][dy, dx, c]
    sa = jax.nn.sigmoid(acc)
    out = jnp.maximum(y * sa + x, 0.0)
    return jnp.transpose(out, (0, 3, 1, 2))


# ----------------------------- main -----------------------------

if __name__ == "__main__":
    key = jax.random.PRNGKey(0)
    kx, kp = jax.random.split(key)
    inplanes, planes = 64, 16          # out channels = planes*4 = inplanes (identity add)
    N, H, W = 2, 8, 8
    x = jax.random.normal(kx, (N, inplanes, H, W), jnp.float32)
    params = init_params(kp, inplanes, planes)

    out = jax.jit(bottleneck_forward)(x, params)
    out = jax.block_until_ready(out)
    assert out.shape == (N, planes * 4, H, W)

    ref = bottleneck_reference(x, params)
    if not jnp.allclose(out, ref, atol=2e-2, rtol=2e-2):
        raise SystemExit(f"mismatch: max abs err = {float(jnp.max(jnp.abs(out - ref)))}")
    print("KERNEL_OK")
</pallas_src>

<mosaic_0001>
module attributes {stable_mosaic.version = 11 : i64} {
  func.func @_bottleneck_kernel(%arg0: i32, %arg1: memref<1x8x8x64xf32, #tpu.memory_space<vmem>>, %arg2: memref<64x16xf32, #tpu.memory_space<vmem>>, %arg3: memref<1x16xf32, #tpu.memory_space<vmem>>, %arg4: memref<1x16xf32, #tpu.memory_space<vmem>>, %arg5: memref<9x64x64xf32, #tpu.memory_space<vmem>>, %arg6: memref<9x16x16xf32, #tpu.memory_space<vmem>>, %arg7: memref<1x16xf32, #tpu.memory_space<vmem>>, %arg8: memref<1x16xf32, #tpu.memory_space<vmem>>, %arg9: memref<16x64xf32, #tpu.memory_space<vmem>>, %arg10: memref<1x64xf32, #tpu.memory_space<vmem>>, %arg11: memref<1x64xf32, #tpu.memory_space<vmem>>, %arg12: memref<64x4xf32, #tpu.memory_space<vmem>>, %arg13: memref<1x4xf32, #tpu.memory_space<vmem>>, %arg14: memref<4x64xf32, #tpu.memory_space<vmem>>, %arg15: memref<1x64xf32, #tpu.memory_space<vmem>>, %arg16: memref<64x64xf32, #tpu.memory_space<vmem>>, %arg17: memref<64x64xf32, #tpu.memory_space<vmem>>, %arg18: memref<1x1xf32, #tpu.memory_space<vmem>>, %arg19: memref<1x8x8x64xf32, #tpu.memory_space<vmem>>) attributes {dimension_semantics = [#tpu.dimension_semantics<parallel>], iteration_bounds = array<i64: 2>, scalar_prefetch = 0 : i64, scratch_operands = 0 : i64, tpu.core_type = #tpu.core_type<tc>, window_params = [{transform_indices = @transform_0, window_bounds = array<i64: 1, 8, 8, 64>}, {pipeline_mode = #tpu.pipeline_mode<synchronous>, transform_indices = @transform_1, window_bounds = array<i64: 64, 16>}, {pipeline_mode = #tpu.pipeline_mode<synchronous>, transform_indices = @transform_2, window_bounds = array<i64: 1, 16>}, {pipeline_mode = #tpu.pipeline_mode<synchronous>, transform_indices = @transform_3, window_bounds = array<i64: 1, 16>}, {pipeline_mode = #tpu.pipeline_mode<synchronous>, transform_indices = @transform_4, window_bounds = array<i64: 9, 64, 64>}, {pipeline_mode = #tpu.pipeline_mode<synchronous>, transform_indices = @transform_5, window_bounds = array<i64: 9, 16, 16>}, {pipeline_mode = #tpu.pipeline_mode<synchronous>, transform_indices = @transform_6, window_bounds = array<i64: 1, 16>}, {pipeline_mode = #tpu.pipeline_mode<synchronous>, transform_indices = @transform_7, window_bounds = array<i64: 1, 16>}, {pipeline_mode = #tpu.pipeline_mode<synchronous>, transform_indices = @transform_8, window_bounds = array<i64: 16, 64>}, {pipeline_mode = #tpu.pipeline_mode<synchronous>, transform_indices = @transform_9, window_bounds = array<i64: 1, 64>}, {pipeline_mode = #tpu.pipeline_mode<synchronous>, transform_indices = @transform_10, window_bounds = array<i64: 1, 64>}, {pipeline_mode = #tpu.pipeline_mode<synchronous>, transform_indices = @transform_11, window_bounds = array<i64: 64, 4>}, {pipeline_mode = #tpu.pipeline_mode<synchronous>, transform_indices = @transform_12, window_bounds = array<i64: 1, 4>}, {pipeline_mode = #tpu.pipeline_mode<synchronous>, transform_indices = @transform_13, window_bounds = array<i64: 4, 64>}, {pipeline_mode = #tpu.pipeline_mode<synchronous>, transform_indices = @transform_14, window_bounds = array<i64: 1, 64>}, {pipeline_mode = #tpu.pipeline_mode<synchronous>, transform_indices = @transform_15, window_bounds = array<i64: 64, 64>}, {pipeline_mode = #tpu.pipeline_mode<synchronous>, transform_indices = @transform_16, window_bounds = array<i64: 64, 64>}, {pipeline_mode = #tpu.pipeline_mode<synchronous>, transform_indices = @transform_17, window_bounds = array<i64: 1, 1>}, {transform_indices = @transform_18, window_bounds = array<i64: 1, 8, 8, 64>}]} {
    %c0 = arith.constant 0 : index
    %c0_0 = arith.constant 0 : index
    %c0_1 = arith.constant 0 : index
    %c0_2 = arith.constant 0 : index
    %0 = vector.load %arg1[%c0, %c0_0, %c0_1, %c0_2] : memref<1x8x8x64xf32, #tpu.memory_space<vmem>>, vector<1x8x8x64xf32>
    %1 = vector.shape_cast %0 : vector<1x8x8x64xf32> to vector<8x8x64xf32>
    %2 = vector.shape_cast %1 : vector<8x8x64xf32> to vector<64x64xf32>
    %c0_3 = arith.constant 0 : index
    %c0_4 = arith.constant 0 : index
    %3 = vector.load %arg2[%c0_3, %c0_4] : memref<64x16xf32, #tpu.memory_space<vmem>>, vector<64x16xf32>
    %cst = arith.constant dense<0.000000e+00> : vector<64x16xf32>
    %4 = tpu.matmul %2, %3, %cst {dimension_numbers = #tpu.dot_dimension_numbers<[1], [0], [0], [1], [0, 0, 1, 1], [], []>} : vector<64x64xf32>, vector<64x16xf32>, vector<64x16xf32> -> vector<64x16xf32>
    %c0_5 = arith.constant 0 : index
    %c0_6 = arith.constant 0 : index
    %5 = vector.load %arg3[%c0_5, %c0_6] : memref<1x16xf32, #tpu.memory_space<vmem>>, vector<1x16xf32>
    %6 = vector.broadcast %5 : vector<1x16xf32> to vector<64x16xf32>
    %7 = arith.mulf %4, %6 : vector<64x16xf32>
    %c0_7 = arith.constant 0 : index
    %c0_8 = arith.constant 0 : index
    %8 = vector.load %arg4[%c0_7, %c0_8] : memref<1x16xf32, #tpu.memory_space<vmem>>, vector<1x16xf32>
    %9 = vector.broadcast %8 : vector<1x16xf32> to vector<64x16xf32>
    %10 = arith.addf %7, %9 : vector<64x16xf32>
    %cst_9 = arith.constant 0.000000e+00 : f32
    %11 = vector.broadcast %cst_9 : f32 to vector<64x16xf32>
    %12 = arith.maximumf %10, %11 : vector<64x16xf32>
    %cst_10 = arith.constant 0.000000e+00 : f32
    %13 = vector.broadcast %cst_10 : f32 to vector<64x16xf32>
    %c0_11 = arith.constant 0 : index
    %c0_12 = arith.constant 0 : index
    %c0_13 = arith.constant 0 : index
    %14 = vector.load %arg6[%c0_11, %c0_12, %c0_13] : memref<9x16x16xf32, #tpu.memory_space<vmem>>, vector<1x16x16xf32>
    %15 = vector.shape_cast %14 : vector<1x16x16xf32> to vector<16x16xf32>
    %cst_14 = arith.constant dense<0.000000e+00> : vector<64x16xf32>
    %16 = tpu.matmul %12, %15, %cst_14 {dimension_numbers = #tpu.dot_dimension_numbers<[1], [0], [0], [1], [0, 0, 1, 1], [], []>} : vector<64x16xf32>, vector<16x16xf32>, vector<64x16xf32> -> vector<64x16xf32>
    %c0_15 = arith.constant 0 : index
    %c0_16 = arith.constant 0 : index
    %c0_17 = arith.constant 0 : index
    %17 = vector.load %arg5[%c0_15, %c0_16, %c0_17] : memref<9x64x64xf32, #tpu.memory_space<vmem>>, vector<1x64x64xf32>
    %18 = vector.shape_cast %17 : vector<1x64x64xf32> to vector<64x64xf32>
    %cst_18 = arith.constant dense<0.000000e+00> : vector<64x16xf32>
    %19 = tpu.matmul %18, %16, %cst_18 {dimension_numbers = #tpu.dot_dimension_numbers<[1], [0], [0], [1], [0, 0, 1, 1], [], []>} : vector<64x64xf32>, vector<64x16xf32>, vector<64x16xf32> -> vector<64x16xf32>
    %20 = arith.addf %13, %19 : vector<64x16xf32>
    %c1 = arith.constant 1 : index
    %c0_19 = arith.constant 0 : index
    %c0_20 = arith.constant 0 : index
    %21 = vector.load %arg6[%c1, %c0_19, %c0_20] : memref<9x16x16xf32, #tpu.memory_space<vmem>>, vector<1x16x16xf32>
    %22 = vector.shape_cast %21 : vector<1x16x16xf32> to vector<16x16xf32>
    %cst_21 = arith.constant dense<0.000000e+00> : vector<64x16xf32>
    %23 = tpu.matmul %12, %22, %cst_21 {dimension_numbers = #tpu.dot_dimension_numbers<[1], [0], [0], [1], [0, 0, 1, 1], [], []>} : vector<64x16xf32>, vector<16x16xf32>, vector<64x16xf32> -> vector<64x16xf32>
    %c1_22 = arith.constant 1 : index
    %c0_23 = arith.constant 0 : index
    %c0_24 = arith.constant 0 : index
    %24 = vector.load %arg5[%c1_22, %c0_23, %c0_24] : memref<9x64x64xf32, #tpu.memory_space<vmem>>, vector<1x64x64xf32>
    %25 = vector.shape_cast %24 : vector<1x64x64xf32> to vector<64x64xf32>
    %cst_25 = arith.constant dense<0.000000e+00> : vector<64x16xf32>
    %26 = tpu.matmul %25, %23, %cst_25 {dimension_numbers = #tpu.dot_dimension_numbers<[1], [0], [0], [1], [0, 0, 1, 1], [], []>} : vector<64x64xf32>, vector<64x16xf32>, vector<64x16xf32> -> vector<64x16xf32>
    %27 = arith.addf %20, %26 : vector<64x16xf32>
    %c2 = arith.constant 2 : index
    %c0_26 = arith.constant 0 : index
    %c0_27 = arith.constant 0 : index
    %28 = vector.load %arg6[%c2, %c0_26, %c0_27] : memref<9x16x16xf32, #tpu.memory_space<vmem>>, vector<1x16x16xf32>
    %29 = vector.shape_cast %28 : vector<1x16x16xf32> to vector<16x16xf32>
    %cst_28 = arith.constant dense<0.000000e+00> : vector<64x16xf32>
    %30 = tpu.matmul %12, %29, %cst_28 {dimension_numbers = #tpu.dot_dimension_numbers<[1], [0], [0], [1], [0, 0, 1, 1], [], []>} : vector<64x16xf32>, vector<16x16xf32>, vector<64x16xf32> -> vector<64x16xf32>
    %c2_29 = arith.constant 2 : index
    %c0_30 = arith.constant 0 : index
    %c0_31 = arith.constant 0 : index
    %31 = vector.load %arg5[%c2_29, %c0_30, %c0_31] : memref<9x64x64xf32, #tpu.memory_space<vmem>>, vector<1x64x64xf32>
    %32 = vector.shape_cast %31 : vector<1x64x64xf32> to vector<64x64xf32>
    %cst_32 = arith.constant dense<0.000000e+00> : vector<64x16xf32>
    %33 = tpu.matmul %32, %30, %cst_32 {dimension_numbers = #tpu.dot_dimension_numbers<[1], [0], [0], [1], [0, 0, 1, 1], [], []>} : vector<64x64xf32>, vector<64x16xf32>, vector<64x16xf32> -> vector<64x16xf32>
    %34 = arith.addf %27, %33 : vector<64x16xf32>
    %c3 = arith.constant 3 : index
    %c0_33 = arith.constant 0 : index
    %c0_34 = arith.constant 0 : index
    %35 = vector.load %arg6[%c3, %c0_33, %c0_34] : memref<9x16x16xf32, #tpu.memory_space<vmem>>, vector<1x16x16xf32>
    %36 = vector.shape_cast %35 : vector<1x16x16xf32> to vector<16x16xf32>
    %cst_35 = arith.constant dense<0.000000e+00> : vector<64x16xf32>
    %37 = tpu.matmul %12, %36, %cst_35 {dimension_numbers = #tpu.dot_dimension_numbers<[1], [0], [0], [1], [0, 0, 1, 1], [], []>} : vector<64x16xf32>, vector<16x16xf32>, vector<64x16xf32> -> vector<64x16xf32>
    %c3_36 = arith.constant 3 : index
    %c0_37 = arith.constant 0 : index
    %c0_38 = arith.constant 0 : index
    %38 = vector.load %arg5[%c3_36, %c0_37, %c0_38] : memref<9x64x64xf32, #tpu.memory_space<vmem>>, vector<1x64x64xf32>
    %39 = vector.shape_cast %38 : vector<1x64x64xf32> to vector<64x64xf32>
    %cst_39 = arith.constant dense<0.000000e+00> : vector<64x16xf32>
    %40 = tpu.matmul %39, %37, %cst_39 {dimension_numbers = #tpu.dot_dimension_numbers<[1], [0], [0], [1], [0, 0, 1, 1], [], []>} : vector<64x64xf32>, vector<64x16xf32>, vector<64x16xf32> -> vector<64x16xf32>
    %41 = arith.addf %34, %40 : vector<64x16xf32>
    %c4 = arith.constant 4 : index
    %c0_40 = arith.constant 0 : index
    %c0_41 = arith.constant 0 : index
    %42 = vector.load %arg6[%c4, %c0_40, %c0_41] : memref<9x16x16xf32, #tpu.memory_space<vmem>>, vector<1x16x16xf32>
    %43 = vector.shape_cast %42 : vector<1x16x16xf32> to vector<16x16xf32>
    %cst_42 = arith.constant dense<0.000000e+00> : vector<64x16xf32>
    %44 = tpu.matmul %12, %43, %cst_42 {dimension_numbers = #tpu.dot_dimension_numbers<[1], [0], [0], [1], [0, 0, 1, 1], [], []>} : vector<64x16xf32>, vector<16x16xf32>, vector<64x16xf32> -> vector<64x16xf32>
    %c4_43 = arith.constant 4 : index
    %c0_44 = arith.constant 0 : index
    %c0_45 = arith.constant 0 : index
    %45 = vector.load %arg5[%c4_43, %c0_44, %c0_45] : memref<9x64x64xf32, #tpu.memory_space<vmem>>, vector<1x64x64xf32>
    %46 = vector.shape_cast %45 : vector<1x64x64xf32> to vector<64x64xf32>
    %cst_46 = arith.constant dense<0.000000e+00> : vector<64x16xf32>
    %47 = tpu.matmul %46, %44, %cst_46 {dimension_numbers = #tpu.dot_dimension_numbers<[1], [0], [0], [1], [0, 0, 1, 1], [], []>} : vector<64x64xf32>, vector<64x16xf32>, vector<64x16xf32> -> vector<64x16xf32>
    %48 = arith.addf %41, %47 : vector<64x16xf32>
    %c5 = arith.constant 5 : index
    %c0_47 = arith.constant 0 : index
    %c0_48 = arith.constant 0 : index
    %49 = vector.load %arg6[%c5, %c0_47, %c0_48] : memref<9x16x16xf32, #tpu.memory_space<vmem>>, vector<1x16x16xf32>
    %50 = vector.shape_cast %49 : vector<1x16x16xf32> to vector<16x16xf32>
    %cst_49 = arith.constant dense<0.000000e+00> : vector<64x16xf32>
    %51 = tpu.matmul %12, %50, %cst_49 {dimension_numbers = #tpu.dot_dimension_numbers<[1], [0], [0], [1], [0, 0, 1, 1], [], []>} : vector<64x16xf32>, vector<16x16xf32>, vector<64x16xf32> -> vector<64x16xf32>
    %c5_50 = arith.constant 5 : index
    %c0_51 = arith.constant 0 : index
    %c0_52 = arith.constant 0 : index
    %52 = vector.load %arg5[%c5_50, %c0_51, %c0_52] : memref<9x64x64xf32, #tpu.memory_space<vmem>>, vector<1x64x64xf32>
    %53 = vector.shape_cast %52 : vector<1x64x64xf32> to vector<64x64xf32>
    %cst_53 = arith.constant dense<0.000000e+00> : vector<64x16xf32>
    %54 = tpu.matmul %53, %51, %cst_53 {dimension_numbers = #tpu.dot_dimension_numbers<[1], [0], [0], [1], [0, 0, 1, 1], [], []>} : vector<64x64xf32>, vector<64x16xf32>, vector<64x16xf32> -> vector<64x16xf32>
    %55 = arith.addf %48, %54 : vector<64x16xf32>
    %c6 = arith.constant 6 : index
    %c0_54 = arith.constant 0 : index
    %c0_55 = arith.constant 0 : index
    %56 = vector.load %arg6[%c6, %c0_54, %c0_55] : memref<9x16x16xf32, #tpu.memory_space<vmem>>, vector<1x16x16xf32>
    %57 = vector.shape_cast %56 : vector<1x16x16xf32> to vector<16x16xf32>
    %cst_56 = arith.constant dense<0.000000e+00> : vector<64x16xf32>
    %58 = tpu.matmul %12, %57, %cst_56 {dimension_numbers = #tpu.dot_dimension_numbers<[1], [0], [0], [1], [0, 0, 1, 1], [], []>} : vector<64x16xf32>, vector<16x16xf32>, vector<64x16xf32> -> vector<64x16xf32>
    %c6_57 = arith.constant 6 : index
    %c0_58 = arith.constant 0 : index
    %c0_59 = arith.constant 0 : index
    %59 = vector.load %arg5[%c6_57, %c0_58, %c0_59] : memref<9x64x64xf32, #tpu.memory_space<vmem>>, vector<1x64x64xf32>
    %60 = vector.shape_cast %59 : vector<1x64x64xf32> to vector<64x64xf32>
    %cst_60 = arith.constant dense<0.000000e+00> : vector<64x16xf32>
    %61 = tpu.matmul %60, %58, %cst_60 {dimension_numbers = #tpu.dot_dimension_numbers<[1], [0], [0], [1], [0, 0, 1, 1], [], []>} : vector<64x64xf32>, vector<64x16xf32>, vector<64x16xf32> -> vector<64x16xf32>
    %62 = arith.addf %55, %61 : vector<64x16xf32>
    %c7 = arith.constant 7 : index
    %c0_61 = arith.constant 0 : index
    %c0_62 = arith.constant 0 : index
    %63 = vector.load %arg6[%c7, %c0_61, %c0_62] : memref<9x16x16xf32, #tpu.memory_space<vmem>>, vector<1x16x16xf32>
    %64 = vector.shape_cast %63 : vector<1x16x16xf32> to vector<16x16xf32>
    %cst_63 = arith.constant dense<0.000000e+00> : vector<64x16xf32>
    %65 = tpu.matmul %12, %64, %cst_63 {dimension_numbers = #tpu.dot_dimension_numbers<[1], [0], [0], [1], [0, 0, 1, 1], [], []>} : vector<64x16xf32>, vector<16x16xf32>, vector<64x16xf32> -> vector<64x16xf32>
    %c7_64 = arith.constant 7 : index
    %c0_65 = arith.constant 0 : index
    %c0_66 = arith.constant 0 : index
    %66 = vector.load %arg5[%c7_64, %c0_65, %c0_66] : memref<9x64x64xf32, #tpu.memory_space<vmem>>, vector<1x64x64xf32>
    %67 = vector.shape_cast %66 : vector<1x64x64xf32> to vector<64x64xf32>
    %cst_67 = arith.constant dense<0.000000e+00> : vector<64x16xf32>
    %68 = tpu.matmul %67, %65, %cst_67 {dimension_numbers = #tpu.dot_dimension_numbers<[1], [0], [0], [1], [0, 0, 1, 1], [], []>} : vector<64x64xf32>, vector<64x16xf32>, vector<64x16xf32> -> vector<64x16xf32>
    %69 = arith.addf %62, %68 : vector<64x16xf32>
    %c8 = arith.constant 8 : index
    %c0_68 = arith.constant 0 : index
    %c0_69 = arith.constant 0 : index
    %70 = vector.load %arg6[%c8, %c0_68, %c0_69] : memref<9x16x16xf32, #tpu.memory_space<vmem>>, vector<1x16x16xf32>
    %71 = vector.shape_cast %70 : vector<1x16x16xf32> to vector<16x16xf32>
    %cst_70 = arith.constant dense<0.000000e+00> : vector<64x16xf32>
    %72 = tpu.matmul %12, %71, %cst_70 {dimension_numbers = #tpu.dot_dimension_numbers<[1], [0], [0], [1], [0, 0, 1, 1], [], []>} : vector<64x16xf32>, vector<16x16xf32>, vector<64x16xf32> -> vector<64x16xf32>
    %c8_71 = arith.constant 8 : index
    %c0_72 = arith.constant 0 : index
    %c0_73 = arith.constant 0 : index
    %73 = vector.load %arg5[%c8_71, %c0_72, %c0_73] : memref<9x64x64xf32, #tpu.memory_space<vmem>>, vector<1x64x64xf32>
    %74 = vector.shape_cast %73 : vector<1x64x64xf32> to vector<64x64xf32>
    %cst_74 = arith.constant dense<0.000000e+00> : vector<64x16xf32>
    %75 = tpu.matmul %74, %72, %cst_74 {dimension_numbers = #tpu.dot_dimension_numbers<[1], [0], [0], [1], [0, 0, 1, 1], [], []>} : vector<64x64xf32>, vector<64x16xf32>, vector<64x16xf32> -> vector<64x16xf32>
    %76 = arith.addf %69, %75 : vector<64x16xf32>
    %c0_75 = arith.constant 0 : index
    %c0_76 = arith.constant 0 : index
    %77 = vector.load %arg7[%c0_75, %c0_76] : memref<1x16xf32, #tpu.memory_space<vmem>>, vector<1x16xf32>
    %78 = vector.broadcast %77 : vector<1x16xf32> to vector<64x16xf32>
    %79 = arith.mulf %76, %78 : vector<64x16xf32>
    %c0_77 = arith.constant 0 : index
    %c0_78 = arith.constant 0 : index
    %80 = vector.load %arg8[%c0_77, %c0_78] : memref<1x16xf32, #tpu.memory_space<vmem>>, vector<1x16xf32>
    %81 = vector.broadcast %80 : vector<1x16xf32> to vector<64x16xf32>
    %82 = arith.addf %79, %81 : vector<64x16xf32>
    %cst_79 = arith.constant 0.000000e+00 : f32
    %83 = vector.broadcast %cst_79 : f32 to vector<64x16xf32>
    %84 = arith.maximumf %82, %83 : vector<64x16xf32>
    %c0_80 = arith.constant 0 : index
    %c0_81 = arith.constant 0 : index
    %85 = vector.load %arg9[%c0_80, %c0_81] : memref<16x64xf32, #tpu.memory_space<vmem>>, vector<16x64xf32>
    %cst_82 = arith.constant dense<0.000000e+00> : vector<64x64xf32>
    %86 = tpu.matmul %84, %85, %cst_82 {dimension_numbers = #tpu.dot_dimension_numbers<[1], [0], [0], [1], [0, 0, 1, 1], [], []>} : vector<64x16xf32>, vector<16x64xf32>, vector<64x64xf32> -> vector<64x64xf32>
    %c0_83 = arith.constant 0 : index
    %c0_84 = arith.constant 0 : index
    %87 = vector.load %arg10[%c0_83, %c0_84] : memref<1x64xf32, #tpu.memory_space<vmem>>, vector<1x64xf32>
    %88 = vector.broadcast %87 : vector<1x64xf32> to vector<64x64xf32>
    %89 = arith.mulf %86, %88 : vector<64x64xf32>
    %c0_85 = arith.constant 0 : index
    %c0_86 = arith.constant 0 : index
    %90 = vector.load %arg11[%c0_85, %c0_86] : memref<1x64xf32, #tpu.memory_space<vmem>>, vector<1x64xf32>
    %91 = vector.broadcast %90 : vector<1x64xf32> to vector<64x64xf32>
    %92 = arith.addf %89, %91 : vector<64x64xf32>
    %cst_87 = arith.constant dense<0.000000e+00> : vector<64xf32>
    %93 = vector.multi_reduction <add>, %92, %cst_87 [0] : vector<64x64xf32> to vector<64xf32>
    %94 = vector.shape_cast %93 : vector<64xf32> to vector<1x64xf32>
    %cst_88 = arith.constant 6.400000e+01 : f32
    %95 = vector.broadcast %cst_88 : f32 to vector<1x64xf32>
    %96 = arith.divf %94, %95 : vector<1x64xf32>
    %cst_89 = arith.constant dense<0xFF800000> : vector<64xf32>
    %97 = vector.multi_reduction <maximumf>, %92, %cst_89 [0] : vector<64x64xf32> to vector<64xf32>
    %98 = vector.shape_cast %97 : vector<64xf32> to vector<1x64xf32>
    %99 = tpu.concatenate %96, %98 in 0 : vector<1x64xf32>, vector<1x64xf32> -> vector<2x64xf32>
    %c0_90 = arith.constant 0 : index
    %c0_91 = arith.constant 0 : index
    %100 = vector.load %arg12[%c0_90, %c0_91] : memref<64x4xf32, #tpu.memory_space<vmem>>, vector<64x4xf32>
    %cst_92 = arith.constant dense<0.000000e+00> : vector<2x4xf32>
    %101 = tpu.matmul %99, %100, %cst_92 {dimension_numbers = #tpu.dot_dimension_numbers<[1], [0], [0], [1], [0, 0, 1, 1], [], []>} : vector<2x64xf32>, vector<64x4xf32>, vector<2x4xf32> -> vector<2x4xf32>
    %c0_93 = arith.constant 0 : index
    %c0_94 = arith.constant 0 : index
    %102 = vector.load %arg13[%c0_93, %c0_94] : memref<1x4xf32, #tpu.memory_space<vmem>>, vector<1x4xf32>
    %103 = vector.broadcast %102 : vector<1x4xf32> to vector<2x4xf32>
    %104 = arith.addf %101, %103 : vector<2x4xf32>
    %cst_95 = arith.constant 0.000000e+00 : f32
    %105 = vector.broadcast %cst_95 : f32 to vector<2x4xf32>
    %106 = arith.maximumf %104, %105 : vector<2x4xf32>
    %c0_96 = arith.constant 0 : index
    %c0_97 = arith.constant 0 : index
    %107 = vector.load %arg14[%c0_96, %c0_97] : memref<4x64xf32, #tpu.memory_space<vmem>>, vector<4x64xf32>
    %cst_98 = arith.constant dense<0.000000e+00> : vector<2x64xf32>
    %108 = tpu.matmul %106, %107, %cst_98 {dimension_numbers = #tpu.dot_dimension_numbers<[1], [0], [0], [1], [0, 0, 1, 1], [], []>} : vector<2x4xf32>, vector<4x64xf32>, vector<2x64xf32> -> vector<2x64xf32>
    %c0_99 = arith.constant 0 : index
    %c0_100 = arith.constant 0 : index
    %109 = vector.load %arg15[%c0_99, %c0_100] : memref<1x64xf32, #tpu.memory_space<vmem>>, vector<1x64xf32>
    %110 = vector.broadcast %109 : vector<1x64xf32> to vector<2x64xf32>
    %111 = arith.addf %108, %110 : vector<2x64xf32>
    %cst_101 = arith.constant dense<0.000000e+00> : vector<64xf32>
    %112 = vector.multi_reduction <add>, %111, %cst_101 [0] : vector<2x64xf32> to vector<64xf32>
    %113 = vector.shape_cast %112 : vector<64xf32> to vector<1x64xf32>
    %114 = arith.negf %113 : vector<1x64xf32>
    %115 = math.exp %114 : vector<1x64xf32>
    %cst_102 = arith.constant 1.000000e+00 : f32
    %116 = vector.broadcast %cst_102 : f32 to vector<1x64xf32>
    %117 = arith.addf %116, %115 : vector<1x64xf32>
    %118 = arith.divf %116, %117 : vector<1x64xf32>
    %119 = vector.broadcast %118 : vector<1x64xf32> to vector<64x64xf32>
    %120 = arith.mulf %92, %119 : vector<64x64xf32>
    %cst_103 = arith.constant dense<0.000000e+00> : vector<64xf32>
    %121 = vector.multi_reduction <add>, %120, %cst_103 [1] : vector<64x64xf32> to vector<64xf32>
    %122 = vector.shape_cast %121 : vector<64xf32> to vector<64x1xf32>
    %cst_104 = arith.constant 6.400000e+01 : f32
    %123 = vector.broadcast %cst_104 : f32 to vector<64x1xf32>
    %124 = arith.divf %122, %123 : vector<64x1xf32>
    %125 = vector.shape_cast %124 : vector<64x1xf32> to vector<64x1xf32>
    %126 = vector.broadcast %125 : vector<64x1xf32> to vector<64x64xf32>
    %cst_105 = arith.constant dense<0xFF800000> : vector<64xf32>
    %127 = vector.multi_reduction <maximumf>, %120, %cst_105 [1] : vector<64x64xf32> to vector<64xf32>
    %128 = vector.shape_cast %127 : vector<64xf32> to vector<64x1xf32>
    %129 = vector.shape_cast %128 : vector<64x1xf32> to vector<64x1xf32>
    %130 = vector.broadcast %129 : vector<64x1xf32> to vector<64x64xf32>
    %c0_106 = arith.constant 0 : index
    %c0_107 = arith.constant 0 : index
    %131 = vector.load %arg16[%c0_106, %c0_107] : memref<64x64xf32, #tpu.memory_space<vmem>>, vector<64x64xf32>
    %cst_108 = arith.constant dense<0.000000e+00> : vector<64x64xf32>
    %132 = tpu.matmul %131, %126, %cst_108 {dimension_numbers = #tpu.dot_dimension_numbers<[1], [0], [0], [1], [0, 0, 1, 1], [], []>} : vector<64x64xf32>, vector<64x64xf32>, vector<64x64xf32> -> vector<64x64xf32>
    %c0_109 = arith.constant 0 : index
    %c0_110 = arith.constant 0 : index
    %133 = vector.load %arg17[%c0_109, %c0_110] : memref<64x64xf32, #tpu.memory_space<vmem>>, vector<64x64xf32>
    %cst_111 = arith.constant dense<0.000000e+00> : vector<64x64xf32>
    %134 = tpu.matmul %133, %130, %cst_111 {dimension_numbers = #tpu.dot_dimension_numbers<[1], [0], [0], [1], [0, 0, 1, 1], [], []>} : vector<64x64xf32>, vector<64x64xf32>, vector<64x64xf32> -> vector<64x64xf32>
    %135 = arith.addf %132, %134 : vector<64x64xf32>
    %c0_112 = arith.constant 0 : index
    %c0_113 = arith.constant 0 : index
    %136 = vector.load %arg18[%c0_112, %c0_113] : memref<1x1xf32, #tpu.memory_space<vmem>>, vector<1x1xf32>
    %137 = vector.broadcast %136 : vector<1x1xf32> to vector<64x64xf32>
    %138 = arith.addf %135, %137 : vector<64x64xf32>
    %139 = arith.negf %138 : vector<64x64xf32>
    %140 = math.exp %139 : vector<64x64xf32>
    %cst_114 = arith.constant 1.000000e+00 : f32
    %141 = vector.broadcast %cst_114 : f32 to vector<64x64xf32>
    %142 = arith.addf %141, %140 : vector<64x64xf32>
    %143 = arith.divf %141, %142 : vector<64x64xf32>
    %144 = arith.mulf %120, %143 : vector<64x64xf32>
    %145 = arith.addf %144, %2 : vector<64x64xf32>
    %cst_115 = arith.constant 0.000000e+00 : f32
    %146 = vector.broadcast %cst_115 : f32 to vector<64x64xf32>
    %147 = arith.maximumf %145, %146 : vector<64x64xf32>
    %148 = vector.shape_cast %147 : vector<64x64xf32> to vector<1x8x8x64xf32>
    %c0_116 = arith.constant 0 : index
    %c0_117 = arith.constant 0 : index
    %c0_118 = arith.constant 0 : index
    %c0_119 = arith.constant 0 : index
    %149 = vector.load %arg19[%c0_116, %c0_117, %c0_118, %c0_119] : memref<1x8x8x64xf32, #tpu.memory_space<vmem>>, vector<1x8x8x64xf32>
    tpu.vector_store %arg19[%c0_116, %c0_117, %c0_118, %c0_119], %148 {strides = array<i32>} : memref<1x8x8x64xf32, #tpu.memory_space<vmem>>, vector<1x8x8x64xf32>,
    return
  }
  func.func @transform_0(%arg0: i32) -> (i32, i32, i32, i32) {
    %c0_i32 = arith.constant 0 : i32
    %c0_i32_0 = arith.constant 0 : i32
    %c0_i32_1 = arith.constant 0 : i32
    %c0_i32_2 = arith.constant 0 : i32
    return %arg0, %c0_i32, %c0_i32_0, %c0_i32_1 : i32, i32, i32, i32
  }
  func.func @transform_1(%arg0: i32) -> (i32, i32) {
    %c0_i32 = arith.constant 0 : i32
    %c0_i32_0 = arith.constant 0 : i32
    %c0_i32_1 = arith.constant 0 : i32
    return %c0_i32, %c0_i32_0 : i32, i32
  }
  func.func @transform_2(%arg0: i32) -> (i32, i32) {
    %c0_i32 = arith.constant 0 : i32
    %c0_i32_0 = arith.constant 0 : i32
    %c0_i32_1 = arith.constant 0 : i32
    return %c0_i32, %c0_i32_0 : i32, i32
  }
  func.func @transform_3(%arg0: i32) -> (i32, i32) {
    %c0_i32 = arith.constant 0 : i32
    %c0_i32_0 = arith.constant 0 : i32
    %c0_i32_1 = arith.constant 0 : i32
    return %c0_i32, %c0_i32_0 : i32, i32
  }
  func.func @transform_4(%arg0: i32) -> (i32, i32, i32) {
    %c0_i32 = arith.constant 0 : i32
    %c0_i32_0 = arith.constant 0 : i32
    %c0_i32_1 = arith.constant 0 : i32
    %c0_i32_2 = arith.constant 0 : i32
    return %c0_i32, %c0_i32_0, %c0_i32_1 : i32, i32, i32
  }
  func.func @transform_5(%arg0: i32) -> (i32, i32, i32) {
    %c0_i32 = arith.constant 0 : i32
    %c0_i32_0 = arith.constant 0 : i32
    %c0_i32_1 = arith.constant 0 : i32
    %c0_i32_2 = arith.constant 0 : i32
    return %c0_i32, %c0_i32_0, %c0_i32_1 : i32, i32, i32
  }
  func.func @transform_6(%arg0: i32) -> (i32, i32) {
    %c0_i32 = arith.constant 0 : i32
    %c0_i32_0 = arith.constant 0 : i32
    %c0_i32_1 = arith.constant 0 : i32
    return %c0_i32, %c0_i32_0 : i32, i32
  }
  func.func @transform_7(%arg0: i32) -> (i32, i32) {
    %c0_i32 = arith.constant 0 : i32
    %c0_i32_0 = arith.constant 0 : i32
    %c0_i32_1 = arith.constant 0 : i32
    return %c0_i32, %c0_i32_0 : i32, i32
  }
  func.func @transform_8(%arg0: i32) -> (i32, i32) {
    %c0_i32 = arith.constant 0 : i32
    %c0_i32_0 = arith.constant 0 : i32
    %c0_i32_1 = arith.constant 0 : i32
    return %c0_i32, %c0_i32_0 : i32, i32
  }
  func.func @transform_9(%arg0: i32) -> (i32, i32) {
    %c0_i32 = arith.constant 0 : i32
    %c0_i32_0 = arith.constant 0 : i32
    %c0_i32_1 = arith.constant 0 : i32
    return %c0_i32, %c0_i32_0 : i32, i32
  }
  func.func @transform_10(%arg0: i32) -> (i32, i32) {
    %c0_i32 = arith.constant 0 : i32
    %c0_i32_0 = arith.constant 0 : i32
    %c0_i32_1 = arith.constant 0 : i32
    return %c0_i32, %c0_i32_0 : i32, i32
  }
  func.func @transform_11(%arg0: i32) -> (i32, i32) {
    %c0_i32 = arith.constant 0 : i32
    %c0_i32_0 = arith.constant 0 : i32
    %c0_i32_1 = arith.constant 0 : i32
    return %c0_i32, %c0_i32_0 : i32, i32
  }
  func.func @transform_12(%arg0: i32) -> (i32, i32) {
    %c0_i32 = arith.constant 0 : i32
    %c0_i32_0 = arith.constant 0 : i32
    %c0_i32_1 = arith.constant 0 : i32
    return %c0_i32, %c0_i32_0 : i32, i32
  }
  func.func @transform_13(%arg0: i32) -> (i32, i32) {
    %c0_i32 = arith.constant 0 : i32
    %c0_i32_0 = arith.constant 0 : i32
    %c0_i32_1 = arith.constant 0 : i32
    return %c0_i32, %c0_i32_0 : i32, i32
  }
  func.func @transform_14(%arg0: i32) -> (i32, i32) {
    %c0_i32 = arith.constant 0 : i32
    %c0_i32_0 = arith.constant 0 : i32
    %c0_i32_1 = arith.constant 0 : i32
    return %c0_i32, %c0_i32_0 : i32, i32
  }
  func.func @transform_15(%arg0: i32) -> (i32, i32) {
    %c0_i32 = arith.constant 0 : i32
    %c0_i32_0 = arith.constant 0 : i32
    %c0_i32_1 = arith.constant 0 : i32
    return %c0_i32, %c0_i32_0 : i32, i32
  }
  func.func @transform_16(%arg0: i32) -> (i32, i32) {
    %c0_i32 = arith.constant 0 : i32
    %c0_i32_0 = arith.constant 0 : i32
    %c0_i32_1 = arith.constant 0 : i32
    return %c0_i32, %c0_i32_0 : i32, i32
  }
  func.func @transform_17(%arg0: i32) -> (i32, i32) {
    %c0_i32 = arith.constant 0 : i32
    %c0_i32_0 = arith.constant 0 : i32
    %c0_i32_1 = arith.constant 0 : i32
    return %c0_i32, %c0_i32_0 : i32, i32
  }
  func.func @transform_18(%arg0: i32) -> (i32, i32, i32, i32) {
    %c0_i32 = arith.constant 0 : i32
    %c0_i32_0 = arith.constant 0 : i32
    %c0_i32_1 = arith.constant 0 : i32
    %c0_i32_2 = arith.constant 0 : i32
    return %arg0, %c0_i32, %c0_i32_0, %c0_i32_1 : i32, i32, i32, i32
  }
}

</mosaic_0001>

<llo_original>
// kernel: bottleneck_forward.1
$region0: #{bottleneck_forward.1}
  #allocation0 [shape = 'u32[]', space=smem, size = 0x4, offset = 0x4, fixed_abs, tag = 'smem constant byte address 0x4 - core index']
  #allocation1 [shape = 'u32[72,128]{1,0:T(1,128)}', space=vmem, size = 0x9000, scoped, tag = 'internal scratch']
  #allocation2 [shape = 'f32[1,1]{1,0:T(1,128)S(1)}', space=vmem, size = 0x200, scoped, tag = 'scoped memory for bottleneck_forward.1']
  %s0 = inlined_call_operand.vmem [shape: f32[2,8,8,64], index: 0, kind: input, shape index: {}]
  %s1 = inlined_call_operand.vmem [shape: f32[64,16], index: 1, kind: input, shape index: {}]
  %s2 = inlined_call_operand.vmem [shape: f32[1,16], index: 2, kind: input, shape index: {}]
  %s3 = inlined_call_operand.vmem [shape: f32[1,16], index: 3, kind: input, shape index: {}]
  %s4 = inlined_call_operand.vmem [shape: f32[9,64,64], index: 4, kind: input, shape index: {}]
  %s5 = inlined_call_operand.vmem [shape: f32[9,16,16], index: 5, kind: input, shape index: {}]
  %s6 = inlined_call_operand.vmem [shape: f32[1,16], index: 6, kind: input, shape index: {}]
  %s7 = inlined_call_operand.vmem [shape: f32[1,16], index: 7, kind: input, shape index: {}]
  %s8 = inlined_call_operand.vmem [shape: f32[16,64], index: 8, kind: input, shape index: {}]
  %s9 = inlined_call_operand.vmem [shape: f32[1,64], index: 9, kind: input, shape index: {}]
  %s10 = inlined_call_operand.vmem [shape: f32[1,64], index: 10, kind: input, shape index: {}]
  %s11 = inlined_call_operand.vmem [shape: f32[64,4], index: 11, kind: input, shape index: {}]
  %s12 = inlined_call_operand.vmem [shape: f32[1,4], index: 12, kind: input, shape index: {}]
  %s13 = inlined_call_operand.vmem [shape: f32[4,64], index: 13, kind: input, shape index: {}]
  %s14 = inlined_call_operand.vmem [shape: f32[1,64], index: 14, kind: input, shape index: {}]
  %s15 = inlined_call_operand.vmem [shape: f32[64,64], index: 15, kind: input, shape index: {}]
  %s16 = inlined_call_operand.vmem [shape: f32[64,64], index: 16, kind: input, shape index: {}]
  %s17 = inlined_call_operand.<no memory space> [shape: f32[1,1], index: 17, kind: input, shape index: {}]
  %s18 = inlined_call_operand.hbm [shape: f32[2,8,8,64], index: 18, kind: output, shape index: {}]
  %s19 = sld [smem:[#allocation0]]
  $region105: #{bottleneck_forward.1} parent=0
    _
  %s21 = ssub.s32 1, %s19
  %s22 = scalar_select 0, %s21, %s19
  %v23 = vstv %s17
  %24 = vst [vmem:[#allocation2] sm:$0x1] %v23
  $region1: #{bottleneck_forward.1} parent=0
    #allocation3 [shape = 'u8[65536]{0}', space=vmem, size = 0x10000, scoped, tag = 'output window, operand 0']
    #allocation4 [shape = 's32[2]{0}', space=sflag, size = 0x8, scoped, tag = 'scoped memory for bottleneck_forward.1']
    %25 = vsyncpa [#allocation4], 0
    %s26 = scalar_lea.sflag [#allocation4], 1
    %27 = vsyncpa %s26, 0
    loop: start=0, step=1, limit=4
    $region2: #{bottleneck_forward.1} parent=1 // loop_pre_header
      _
    $region3: #{bottleneck_forward.1} parent=1 // loop_header
      %s29 = sphi 0, %s33
      %p30 = scmp.ge.s32.totalorder %s29, 4
      %s39 = sphi 0, %s41
      %s42 = sphi 0, %s39
      %s43 = sphi 0, %s42
      %s59 = sphi 0, %s43
      %s63 = sphi 0, %s63
      %s65 = sphi 0, %s63
      %s66 = sphi 0, %s65
      %s80 = sphi 0, %s66
      %s84 = sphi 0, %s84
      %s86 = sphi 0, %s84
      %s87 = sphi 0, %s86
      %s101 = sphi 0, %s87
      %s105 = sphi 0, %s105
      %s107 = sphi 0, %s105
      %s108 = sphi 0, %s107
      %s122 = sphi 0, %s108
      %s126 = sphi 0, %s126
      %s128 = sphi 0, %s126
      %s129 = sphi 0, %s128
      %s143 = sphi 0, %s129
      %s147 = sphi 0, %s147
      %s149 = sphi 0, %s147
      %s150 = sphi 0, %s149
      %s164 = sphi 0, %s150
      %s168 = sphi 0, %s168
      %s170 = sphi 0, %s168
      %s171 = sphi 0, %s170
      %s185 = sphi 0, %s171
      %s189 = sphi 0, %s189
      %s191 = sphi 0, %s189
      %s192 = sphi 0, %s191
      %s206 = sphi 0, %s192
      %s210 = sphi 0, %s210
      %s212 = sphi 0, %s210
      %s213 = sphi 0, %s212
      %s227 = sphi 0, %s213
      %s231 = sphi 0, %s231
      %s233 = sphi 0, %s231
      %s234 = sphi 0, %s233
      %s248 = sphi 0, %s234
      %s252 = sphi 0, %s252
      %s254 = sphi 0, %s252
      %s255 = sphi 0, %s254
      %s269 = sphi 0, %s255
      %s273 = sphi 0, %s273
      %s275 = sphi 0, %s273
      %s276 = sphi 0, %s275
      %s290 = sphi 0, %s276
      %s294 = sphi 0, %s294
      %s296 = sphi 0, %s294
      %s297 = sphi 0, %s296
      %s311 = sphi 0, %s297
      %s315 = sphi 0, %s315
      %s317 = sphi 0, %s315
      %s318 = sphi 0, %s317
      %s332 = sphi 0, %s318
      %s336 = sphi 0, %s336
      %s338 = sphi 0, %s336
      %s339 = sphi 0, %s338
      %s353 = sphi 0, %s339
      %s357 = sphi 0, %s357
      %s359 = sphi 0, %s357
      %s360 = sphi 0, %s359
      %s374 = sphi 0, %s360
      %s378 = sphi 0, %s378
      %s380 = sphi 0, %s378
      %s381 = sphi 0, %s380
      %s395 = sphi 0, %s381
      %s399 = sphi 0, %s399
      %s401 = sphi 0, %s399
      %s402 = sphi 0, %s401
      %s416 = sphi 0, %s402
      %s422 = sphi 0, %s424
      %s425 = sphi 0, %s422
      %s426 = sphi 0, %s425
      %s442 = sphi 0, %s426
    $region4: #{bottleneck_forward.1} parent=1 // loop_header_branch
      %32 = sbr.rel (%p30) target = $region8
    $region5: #{bottleneck_forward.1} parent=1 // loop_body
      %s34 = ssub.s32 %s29, 1
      %s35 = ssub.s32 %s29, 2
      %s36 = sadd.s32 %s29, 1
      %s37 = ssub.s32 %s29, %s36
      %p38 = scmp.eq.s32.totalorder %s37, 0
      %s40 = sadd.s32 %s39, 1
      %s41 = scalar_select %p38, %s39, %s40
      %p44 = pneg %p38
      %p45 = scmp.eq.s32.totalorder %s29, 1
      %p46 = por %p44, %p45
      %p47 = scmp.ne.s32.totalorder %s39, %s42
      %p48 = scmp.eq.s32.totalorder %s29, 0
      %p49 = por %p47, %p48
      %p50 = scmp.ne.s32.totalorder %s39, %s42
      %p51 = scmp.eq.s32.totalorder %s34, 1
      %p52 = por %p50, %p51
      %p53 = scmp.ne.s32.totalorder %s42, %s43
      %p54 = scmp.eq.s32.totalorder %s34, 0
      %p55 = por %p53, %p54
      %p56 = scmp.ne.s32.totalorder %s42, %s43
      %p57 = scmp.eq.s32.totalorder %s35, 1
      %p58 = por %p56, %p57
      %p60 = scmp.ne.s32.totalorder %s43, %s59
      %p61 = scmp.eq.s32.totalorder %s35, 0
      %p62 = por %p60, %p61
      %s64 = sadd.s32 %s63, 1
      %p67 = scmp.eq.s32.totalorder %s29, 1
      %p68 = scmp.ne.s32.totalorder %s63, %s65
      %p69 = scmp.eq.s32.totalorder %s29, 0
      %p70 = por %p68, %p69
      %p71 = scmp.ne.s32.totalorder %s63, %s65
      %p72 = scmp.eq.s32.totalorder %s34, 1
      %p73 = por %p71, %p72
      %p74 = scmp.ne.s32.totalorder %s65, %s66
      %p75 = scmp.eq.s32.totalorder %s34, 0
      %p76 = por %p74, %p75
      %p77 = scmp.ne.s32.totalorder %s65, %s66
      %p78 = scmp.eq.s32.totalorder %s35, 1
      %p79 = por %p77, %p78
      %p81 = scmp.ne.s32.totalorder %s66, %s80
      %p82 = scmp.eq.s32.totalorder %s35, 0
      %p83 = por %p81, %p82
      %s85 = sadd.s32 %s84, 1
      %p88 = scmp.eq.s32.totalorder %s29, 1
      %p89 = scmp.ne.s32.totalorder %s84, %s86
      %p90 = scmp.eq.s32.totalorder %s29, 0
      %p91 = por %p89, %p90
      %p92 = scmp.ne.s32.totalorder %s84, %s86
      %p93 = scmp.eq.s32.totalorder %s34, 1
      %p94 = por %p92, %p93
      %p95 = scmp.ne.s32.totalorder %s86, %s87
      %p96 = scmp.eq.s32.totalorder %s34, 0
      %p97 = por %p95, %p96
      %p98 = scmp.ne.s32.totalorder %s86, %s87
      %p99 = scmp.eq.s32.totalorder %s35, 1
      %p100 = por %p98, %p99
      %p102 = scmp.ne.s32.totalorder %s87, %s101
      %p103 = scmp.eq.s32.totalorder %s35, 0
      %p104 = por %p102, %p103
      %s106 = sadd.s32 %s105, 1
      %p109 = scmp.eq.s32.totalorder %s29, 1
      %p110 = scmp.ne.s32.totalorder %s105, %s107
      %p111 = scmp.eq.s32.totalorder %s29, 0
      %p112 = por %p110, %p111
      %p113 = scmp.ne.s32.totalorder %s105, %s107
      %p114 = scmp.eq.s32.totalorder %s34, 1
      %p115 = por %p113, %p114
      %p116 = scmp.ne.s32.totalorder %s107, %s108
      %p117 = scmp.eq.s32.totalorder %s34, 0
      %p118 = por %p116, %p117
      %p119 = scmp.ne.s32.totalorder %s107, %s108
      %p120 = scmp.eq.s32.totalorder %s35, 1
      %p121 = por %p119, %p120
      %p123 = scmp.ne.s32.totalorder %s108, %s122
      %p124 = scmp.eq.s32.totalorder %s35, 0
      %p125 = por %p123, %p124
      %s127 = sadd.s32 %s126, 1
      %p130 = scmp.eq.s32.totalorder %s29, 1
      %p131 = scmp.ne.s32.totalorder %s126, %s128
      %p132 = scmp.eq.s32.totalorder %s29, 0
      %p133 = por %p131, %p132
      %p134 = scmp.ne.s32.totalorder %s126, %s128
      %p135 = scmp.eq.s32.totalorder %s34, 1
      %p136 = por %p134, %p135
      %p137 = scmp.ne.s32.totalorder %s128, %s129
      %p138 = scmp.eq.s32.totalorder %s34, 0
      %p139 = por %p137, %p138
      %p140 = scmp.ne.s32.totalorder %s128, %s129
      %p141 = scmp.eq.s32.totalorder %s35, 1
      %p142 = por %p140, %p141
      %p144 = scmp.ne.s32.totalorder %s129, %s143
      %p145 = scmp.eq.s32.totalorder %s35, 0
      %p146 = por %p144, %p145
      %s148 = sadd.s32 %s147, 1
      %p151 = scmp.eq.s32.totalorder %s29, 1
      %p152 = scmp.ne.s32.totalorder %s147, %s149
      %p153 = scmp.eq.s32.totalorder %s29, 0
      %p154 = por %p152, %p153
      %p155 = scmp.ne.s32.totalorder %s147, %s149
      %p156 = scmp.eq.s32.totalorder %s34, 1
      %p157 = por %p155, %p156
      %p158 = scmp.ne.s32.totalorder %s149, %s150
      %p159 = scmp.eq.s32.totalorder %s34, 0
      %p160 = por %p158, %p159
      %p161 = scmp.ne.s32.totalorder %s149, %s150
      %p162 = scmp.eq.s32.totalorder %s35, 1
      %p163 = por %p161, %p162
      %p165 = scmp.ne.s32.totalorder %s150, %s164
      %p166 = scmp.eq.s32.totalorder %s35, 0
      %p167 = por %p165, %p166
      %s169 = sadd.s32 %s168, 1
      %p172 = scmp.eq.s32.totalorder %s29, 1
      %p173 = scmp.ne.s32.totalorder %s168, %s170
      %p174 = scmp.eq.s32.totalorder %s29, 0
      %p175 = por %p173, %p174
      %p176 = scmp.ne.s32.totalorder %s168, %s170
      %p177 = scmp.eq.s32.totalorder %s34, 1
      %p178 = por %p176, %p177
      %p179 = scmp.ne.s32.totalorder %s170, %s171
      %p180 = scmp.eq.s32.totalorder %s34, 0
      %p181 = por %p179, %p180
      %p182 = scmp.ne.s32.totalorder %s170, %s171
      %p183 = scmp.eq.s32.totalorder %s35, 1
      %p184 = por %p182, %p183
      %p186 = scmp.ne.s32.totalorder %s171, %s185
      %p187 = scmp.eq.s32.totalorder %s35, 0
      %p188 = por %p186, %p187
      %s190 = sadd.s32 %s189, 1
      %p193 = scmp.eq.s32.totalorder %s29, 1
      %p194 = scmp.ne.s32.totalorder %s189, %s191
      %p195 = scmp.eq.s32.totalorder %s29, 0
      %p196 = por %p194, %p195
      %p197 = scmp.ne.s32.totalorder %s189, %s191
      %p198 = scmp.eq.s32.totalorder %s34, 1
      %p199 = por %p197, %p198
      %p200 = scmp.ne.s32.totalorder %s191, %s192
      %p201 = scmp.eq.s32.totalorder %s34, 0
      %p202 = por %p200, %p201
      %p203 = scmp.ne.s32.totalorder %s191, %s192
      %p204 = scmp.eq.s32.totalorder %s35, 1
      %p205 = por %p203, %p204
      %p207 = scmp.ne.s32.totalorder %s192, %s206
      %p208 = scmp.eq.s32.totalorder %s35, 0
      %p209 = por %p207, %p208
      %s211 = sadd.s32 %s210, 1
      %p214 = scmp.eq.s32.totalorder %s29, 1
      %p215 = scmp.ne.s32.totalorder %s210, %s212
      %p216 = scmp.eq.s32.totalorder %s29, 0
      %p217 = por %p215, %p216
      %p218 = scmp.ne.s32.totalorder %s210, %s212
      %p219 = scmp.eq.s32.totalorder %s34, 1
      %p220 = por %p218, %p219
      %p221 = scmp.ne.s32.totalorder %s212, %s213
      %p222 = scmp.eq.s32.totalorder %s34, 0
      %p223 = por %p221, %p222
      %p224 = scmp.ne.s32.totalorder %s212, %s213
      %p225 = scmp.eq.s32.totalorder %s35, 1
      %p226 = por %p224, %p225
      %p228 = scmp.ne.s32.totalorder %s213, %s227
      %p229 = scmp.eq.s32.totalorder %s35, 0
      %p230 = por %p228, %p229
      %s232 = sadd.s32 %s231, 1
      %p235 = scmp.eq.s32.totalorder %s29, 1
      %p236 = scmp.ne.s32.totalorder %s231, %s233
      %p237 = scmp.eq.s32.totalorder %s29, 0
      %p238 = por %p236, %p237
      %p239 = scmp.ne.s32.totalorder %s231, %s233
      %p240 = scmp.eq.s32.totalorder %s34, 1
      %p241 = por %p239, %p240
      %p242 = scmp.ne.s32.totalorder %s233, %s234
      %p243 = scmp.eq.s32.totalorder %s34, 0
      %p244 = por %p242, %p243
      %p245 = scmp.ne.s32.totalorder %s233, %s234
      %p246 = scmp.eq.s32.totalorder %s35, 1
      %p247 = por %p245, %p246
      %p249 = scmp.ne.s32.totalorder %s234, %s248
      %p250 = scmp.eq.s32.totalorder %s35, 0
      %p251 = por %p249, %p250
      %s253 = sadd.s32 %s252, 1
      %p256 = scmp.eq.s32.totalorder %s29, 1
      %p257 = scmp.ne.s32.totalorder %s252, %s254
      %p258 = scmp.eq.s32.totalorder %s29, 0
      %p259 = por %p257, %p258
      %p260 = scmp.ne.s32.totalorder %s252, %s254
      %p261 = scmp.eq.s32.totalorder %s34, 1
      %p262 = por %p260, %p261
      %p263 = scmp.ne.s32.totalorder %s254, %s255
      %p264 = scmp.eq.s32.totalorder %s34, 0
      %p265 = por %p263, %p264
      %p266 = scmp.ne.s32.totalorder %s254, %s255
      %p267 = scmp.eq.s32.totalorder %s35, 1
      %p268 = por %p266, %p267
      %p270 = scmp.ne.s32.totalorder %s255, %s269
      %p271 = scmp.eq.s32.totalorder %s35, 0
      %p272 = por %p270, %p271
      %s274 = sadd.s32 %s273, 1
      %p277 = scmp.eq.s32.totalorder %s29, 1
      %p278 = scmp.ne.s32.totalorder %s273, %s275
      %p279 = scmp.eq.s32.totalorder %s29, 0
      %p280 = por %p278, %p279
      %p281 = scmp.ne.s32.totalorder %s273, %s275
      %p282 = scmp.eq.s32.totalorder %s34, 1
      %p283 = por %p281, %p282
      %p284 = scmp.ne.s32.totalorder %s275, %s276
      %p285 = scmp.eq.s32.totalorder %s34, 0
      %p286 = por %p284, %p285
      %p287 = scmp.ne.s32.totalorder %s275, %s276
      %p288 = scmp.eq.s32.totalorder %s35, 1
      %p289 = por %p287, %p288
      %p291 = scmp.ne.s32.totalorder %s276, %s290
      %p292 = scmp.eq.s32.totalorder %s35, 0
      %p293 = por %p291, %p292
      %s295 = sadd.s32 %s294, 1
      %p298 = scmp.eq.s32.totalorder %s29, 1
      %p299 = scmp.ne.s32.totalorder %s294, %s296
      %p300 = scmp.eq.s32.totalorder %s29, 0
      %p301 = por %p299, %p300
      %p302 = scmp.ne.s32.totalorder %s294, %s296
      %p303 = scmp.eq.s32.totalorder %s34, 1
      %p304 = por %p302, %p303
      %p305 = scmp.ne.s32.totalorder %s296, %s297
      %p306 = scmp.eq.s32.totalorder %s34, 0
      %p307 = por %p305, %p306
      %p308 = scmp.ne.s32.totalorder %s296, %s297
      %p309 = scmp.eq.s32.totalorder %s35, 1
      %p310 = por %p308, %p309
      %p312 = scmp.ne.s32.totalorder %s297, %s311
      %p313 = scmp.eq.s32.totalorder %s35, 0
      %p314 = por %p312, %p313
      %s316 = sadd.s32 %s315, 1
      %p319 = scmp.eq.s32.totalorder %s29, 1
      %p320 = scmp.ne.s32.totalorder %s315, %s317
      %p321 = scmp.eq.s32.totalorder %s29, 0
      %p322 = por %p320, %p321
      %p323 = scmp.ne.s32.totalorder %s315, %s317
      %p324 = scmp.eq.s32.totalorder %s34, 1
      %p325 = por %p323, %p324
      %p326 = scmp.ne.s32.totalorder %s317, %s318
      %p327 = scmp.eq.s32.totalorder %s34, 0
      %p328 = por %p326, %p327
      %p329 = scmp.ne.s32.totalorder %s317, %s318
      %p330 = scmp.eq.s32.totalorder %s35, 1
      %p331 = por %p329, %p330
      %p333 = scmp.ne.s32.totalorder %s318, %s332
      %p334 = scmp.eq.s32.totalorder %s35, 0
      %p335 = por %p333, %p334
      %s337 = sadd.s32 %s336, 1
      %p340 = scmp.eq.s32.totalorder %s29, 1
      %p341 = scmp.ne.s32.totalorder %s336, %s338
      %p342 = scmp.eq.s32.totalorder %s29, 0
      %p343 = por %p341, %p342
      %p344 = scmp.ne.s32.totalorder %s336, %s338
      %p345 = scmp.eq.s32.totalorder %s34, 1
      %p346 = por %p344, %p345
      %p347 = scmp.ne.s32.totalorder %s338, %s339
      %p348 = scmp.eq.s32.totalorder %s34, 0
      %p349 = por %p347, %p348
      %p350 = scmp.ne.s32.totalorder %s338, %s339
      %p351 = scmp.eq.s32.totalorder %s35, 1
      %p352 = por %p350, %p351
      %p354 = scmp.ne.s32.totalorder %s339, %s353
      %p355 = scmp.eq.s32.totalorder %s35, 0
      %p356 = por %p354, %p355
      %s358 = sadd.s32 %s357, 1
      %p361 = scmp.eq.s32.totalorder %s29, 1
      %p362 = scmp.ne.s32.totalorder %s357, %s359
      %p363 = scmp.eq.s32.totalorder %s29, 0
      %p364 = por %p362, %p363
      %p365 = scmp.ne.s32.totalorder %s357, %s359
      %p366 = scmp.eq.s32.totalorder %s34, 1
      %p367 = por %p365, %p366
      %p368 = scmp.ne.s32.totalorder %s359, %s360
      %p369 = scmp.eq.s32.totalorder %s34, 0
      %p370 = por %p368, %p369
      %p371 = scmp.ne.s32.totalorder %s359, %s360
      %p372 = scmp.eq.s32.totalorder %s35, 1
      %p373 = por %p371, %p372
      %p375 = scmp.ne.s32.totalorder %s360, %s374
      %p376 = scmp.eq.s32.totalorder %s35, 0
      %p377 = por %p375, %p376
      %s379 = sadd.s32 %s378, 1
      %p382 = scmp.eq.s32.totalorder %s29, 1
      %p383 = scmp.ne.s32.totalorder %s378, %s380
      %p384 = scmp.eq.s32.totalorder %s29, 0
      %p385 = por %p383, %p384
      %p386 = scmp.ne.s32.totalorder %s378, %s380
      %p387 = scmp.eq.s32.totalorder %s34, 1
      %p388 = por %p386, %p387
      %p389 = scmp.ne.s32.totalorder %s380, %s381
      %p390 = scmp.eq.s32.totalorder %s34, 0
      %p391 = por %p389, %p390
      %p392 = scmp.ne.s32.totalorder %s380, %s381
      %p393 = scmp.eq.s32.totalorder %s35, 1
      %p394 = por %p392, %p393
      %p396 = scmp.ne.s32.totalorder %s381, %s395
      %p397 = scmp.eq.s32.totalorder %s35, 0
      %p398 = por %p396, %p397
      %s400 = sadd.s32 %s399, 1
      %p403 = scmp.eq.s32.totalorder %s29, 1
      %p404 = scmp.ne.s32.totalorder %s399, %s401
      %p405 = scmp.eq.s32.totalorder %s29, 0
      %p406 = por %p404, %p405
      %p407 = scmp.ne.s32.totalorder %s399, %s401
      %p408 = scmp.eq.s32.totalorder %s34, 1
      %p409 = por %p407, %p408
      %p410 = scmp.ne.s32.totalorder %s401, %s402
      %p411 = scmp.eq.s32.totalorder %s34, 0
      %p412 = por %p410, %p411
      %p413 = scmp.ne.s32.totalorder %s401, %s402
      %p414 = scmp.eq.s32.totalorder %s35, 1
      %p415 = por %p413, %p414
      %p417 = scmp.ne.s32.totalorder %s402, %s416
      %p418 = scmp.eq.s32.totalorder %s35, 0
      %p419 = por %p417, %p418
      %s420 = ssub.s32 %s29, %s36
      %p421 = scmp.eq.s32.totalorder %s420, 0
      %s423 = sadd.s32 %s422, 1
      %s424 = scalar_select %p421, %s422, %s423
      %p427 = pneg %p421
      %p428 = scmp.eq.s32.totalorder %s29, 1
      %p429 = por %p427, %p428
      %p430 = scmp.ne.s32.totalorder %s422, %s425
      %p431 = scmp.eq.s32.totalorder %s29, 0
      %p432 = por %p430, %p431
      %p433 = scmp.ne.s32.totalorder %s422, %s425
      %p434 = scmp.eq.s32.totalorder %s34, 1
      %p435 = por %p433, %p434
      %p436 = scmp.ne.s32.totalorder %s425, %s426
      %p437 = scmp.eq.s32.totalorder %s34, 0
      %p438 = por %p436, %p437
      %p439 = scmp.ne.s32.totalorder %s425, %s426
      %p440 = scmp.eq.s32.totalorder %s35, 1
      %p441 = por %p439, %p440
      %p443 = scmp.ne.s32.totalorder %s426, %s442
      %p444 = scmp.eq.s32.totalorder %s35, 0
      %p445 = por %p443, %p444
      %p446 = scmp.le.s32.totalorder 1, %s29
      %p447 = scmp.lt.s32.totalorder %s29, 3
      %p448 = pnand %p446, %p447
      %p449 = pneg %p448
      // Predicated region
      $region9: #{bottleneck_forward.1} parent=5 // pred_check
        _
      $region10: #{bottleneck_forward.1} parent=5 // pred_check_branch
        %451 = sbr.rel (%p448) target = $region12
      $region11: #{bottleneck_forward.1} parent=5 // pred_region
        %s452 = ssub.s32 %s29, 1
        // Predicated region
        $region13: #{bottleneck_forward.1} parent=11 // pred_check
          %p453 = pneg %p76
        $region14: #{bottleneck_forward.1} parent=11 // pred_check_branch
          %455 = sbr.rel (%p453) target = $region16
        $region15: #{bottleneck_forward.1} parent=11 // pred_region
          _
        $region16: #{bottleneck_forward.1} parent=11 // pred_fallthru
          _
        // Predicated region
        $region17: #{bottleneck_forward.1} parent=11 // pred_check
          %p456 = pneg %p97
        $region18: #{bottleneck_forward.1} parent=11 // pred_check_branch
          %458 = sbr.rel (%p456) target = $region20
        $region19: #{bottleneck_forward.1} parent=11 // pred_region
          _
        $region20: #{bottleneck_forward.1} parent=11 // pred_fallthru
          _
        // Predicated region
        $region21: #{bottleneck_forward.1} parent=11 // pred_check
          %p459 = pneg %p118
        $region22: #{bottleneck_forward.1} parent=11 // pred_check_branch
          %461 = sbr.rel (%p459) target = $region24
        $region23: #{bottleneck_forward.1} parent=11 // pred_region
          _
        $region24: #{bottleneck_forward.1} parent=11 // pred_fallthru
          _
        // Predicated region
        $region25: #{bottleneck_forward.1} parent=11 // pred_check
          %p462 = pneg %p139
        $region26: #{bottleneck_forward.1} parent=11 // pred_check_branch
          %464 = sbr.rel (%p462) target = $region28
        $region27: #{bottleneck_forward.1} parent=11 // pred_region
          _
        $region28: #{bottleneck_forward.1} parent=11 // pred_fallthru
          _
        // Predicated region
        $region29: #{bottleneck_forward.1} parent=11 // pred_check
          %p465 = pneg %p160
        $region30: #{bottleneck_forward.1} parent=11 // pred_check_branch
          %467 = sbr.rel (%p465) target = $region32
        $region31: #{bottleneck_forward.1} parent=11 // pred_region
          _
        $region32: #{bottleneck_forward.1} parent=11 // pred_fallthru
          _
        // Predicated region
        $region33: #{bottleneck_forward.1} parent=11 // pred_check
          %p468 = pneg %p181
        $region34: #{bottleneck_forward.1} parent=11 // pred_check_branch
          %470 = sbr.rel (%p468) target = $region36
        $region35: #{bottleneck_forward.1} parent=11 // pred_region
          _
        $region36: #{bottleneck_forward.1} parent=11 // pred_fallthru
          _
        // Predicated region
        $region37: #{bottleneck_forward.1} parent=11 // pred_check
          %p471 = pneg %p202
        $region38: #{bottleneck_forward.1} parent=11 // pred_check_branch
          %473 = sbr.rel (%p471) target = $region40
        $region39: #{bottleneck_forward.1} parent=11 // pred_region
          _
        $region40: #{bottleneck_forward.1} parent=11 // pred_fallthru
          _
        // Predicated region
        $region41: #{bottleneck_forward.1} parent=11 // pred_check
          %p474 = pneg %p223
        $region42: #{bottleneck_forward.1} parent=11 // pred_check_branch
          %476 = sbr.rel (%p474) target = $region44
        $region43: #{bottleneck_forward.1} parent=11 // pred_region
          _
        $region44: #{bottleneck_forward.1} parent=11 // pred_fallthru
          _
        // Predicated region
        $region45: #{bottleneck_forward.1} parent=11 // pred_check
          %p477 = pneg %p244
        $region46: #{bottleneck_forward.1} parent=11 // pred_check_branch
          %479 = sbr.rel (%p477) target = $region48
        $region47: #{bottleneck_forward.1} parent=11 // pred_region
          _
        $region48: #{bottleneck_forward.1} parent=11 // pred_fallthru
          _
        // Predicated region
        $region49: #{bottleneck_forward.1} parent=11 // pred_check
          %p480 = pneg %p265
        $region50: #{bottleneck_forward.1} parent=11 // pred_check_branch
          %482 = sbr.rel (%p480) target = $region52
        $region51: #{bottleneck_forward.1} parent=11 // pred_region
          _
        $region52: #{bottleneck_forward.1} parent=11 // pred_fallthru
          _
        // Predicated region
        $region53: #{bottleneck_forward.1} parent=11 // pred_check
          %p483 = pneg %p286
        $region54: #{bottleneck_forward.1} parent=11 // pred_check_branch
          %485 = sbr.rel (%p483) target = $region56
        $region55: #{bottleneck_forward.1} parent=11 // pred_region
          _
        $region56: #{bottleneck_forward.1} parent=11 // pred_fallthru
          _
        // Predicated region
        $region57: #{bottleneck_forward.1} parent=11 // pred_check
          %p486 = pneg %p307
        $region58: #{bottleneck_forward.1} parent=11 // pred_check_branch
          %488 = sbr.rel (%p486) target = $region60
        $region59: #{bottleneck_forward.1} parent=11 // pred_region
          _
        $region60: #{bottleneck_forward.1} parent=11 // pred_fallthru
          _
        // Predicated region
        $region61: #{bottleneck_forward.1} parent=11 // pred_check
          %p489 = pneg %p328
        $region62: #{bottleneck_forward.1} parent=11 // pred_check_branch
          %491 = sbr.rel (%p489) target = $region64
        $region63: #{bottleneck_forward.1} parent=11 // pred_region
          _
        $region64: #{bottleneck_forward.1} parent=11 // pred_fallthru
          _
        // Predicated region
        $region65: #{bottleneck_forward.1} parent=11 // pred_check
          %p492 = pneg %p349
        $region66: #{bottleneck_forward.1} parent=11 // pred_check_branch
          %494 = sbr.rel (%p492) target = $region68
        $region67: #{bottleneck_forward.1} parent=11 // pred_region
          _
        $region68: #{bottleneck_forward.1} parent=11 // pred_fallthru
          _
        // Predicated region
        $region69: #{bottleneck_forward.1} parent=11 // pred_check
          %p495 = pneg %p370
        $region70: #{bottleneck_forward.1} parent=11 // pred_check_branch
          %497 = sbr.rel (%p495) target = $region72
        $region71: #{bottleneck_forward.1} parent=11 // pred_region
          _
        $region72: #{bottleneck_forward.1} parent=11 // pred_fallthru
          _
        // Predicated region
        $region73: #{bottleneck_forward.1} parent=11 // pred_check
          %p498 = pneg %p391
        $region74: #{bottleneck_forward.1} parent=11 // pred_check_branch
          %500 = sbr.rel (%p498) target = $region76
        $region75: #{bottleneck_forward.1} parent=11 // pred_region
          _
        $region76: #{bottleneck_forward.1} parent=11 // pred_fallthru
          _
        // Predicated region
        $region77: #{bottleneck_forward.1} parent=11 // pred_check
          %p501 = pneg %p412
        $region78: #{bottleneck_forward.1} parent=11 // pred_check_branch
          %503 = sbr.rel (%p501) target = $region80
        $region79: #{bottleneck_forward.1} parent=11 // pred_region
          _
        $region80: #{bottleneck_forward.1} parent=11 // pred_fallthru
          _
      $region12: #{bottleneck_forward.1} parent=5 // pred_fallthru
        _
      %p504 = scmp.lt.s32.totalorder %s29, 2
      // Predicated region
      $region81: #{bottleneck_forward.1} parent=5 // pred_check
        %p505 = pneg %p504
      $region82: #{bottleneck_forward.1} parent=5 // pred_check_branch
        %507 = sbr.rel (%p505) target = $region84
      $region83: #{bottleneck_forward.1} parent=5 // pred_region
        // Predicated region
        $region85: #{bottleneck_forward.1} parent=83 // pred_check
          %p508 = pneg %p49
        $region86: #{bottleneck_forward.1} parent=83 // pred_check_branch
          %510 = sbr.rel (%p508) target = $region88
        $region87: #{bottleneck_forward.1} parent=83 // pred_region
          %p511 = scmp.lt.s32.totalorder %s29, 1
          %s512 = scalar_select %p511, %s29, 1
          %s513 = smul.addr %s512, 8
          %s514 = smul.addr %s513, 8
          %s515 = scalar_lea.vmem %s0, %s514
        $region88: #{bottleneck_forward.1} parent=83 // pred_fallthru
          _
      $region84: #{bottleneck_forward.1} parent=5 // pred_fallthru
        _
      %p516 = scmp.le.s32.totalorder 1, %s29
      %p517 = scmp.lt.s32.totalorder %s29, 3
      %p518 = pnand %p516, %p517
      %p519 = pneg %p518
      // Predicated region
      $region89: #{bottleneck_forward.1} parent=5 // pred_check
        _
      $region90: #{bottleneck_forward.1} parent=5 // pred_check_branch
        %521 = sbr.rel (%p518) target = $region92
      $region91: #{bottleneck_forward.1} parent=5 // pred_region
        %s522 = ssub.s32 %s29, 1
        %p523 = scmp.lt.s32.totalorder %s34, 1
        %s524 = scalar_select %p523, %s34, 1
        %s525 = smul.addr %s524, 8
        %s526 = smul.addr %s525, 8
        %s527 = scalar_lea.vmem %s0, %s526
        %p528 = pneg %p55
        %p529 = pneg %p52
        %p530 = pneg %p76
        %p531 = pneg %p73
        %p532 = pneg %p97
        %p533 = pneg %p94
        %p534 = pneg %p118
        %p535 = pneg %p115
        %p536 = pneg %p139
        %p537 = pneg %p136
        %p538 = pneg %p160
        %p539 = pneg %p157
        %p540 = pneg %p181
        %p541 = pneg %p178
        %p542 = pneg %p202
        %p543 = pneg %p199
        %p544 = pneg %p223
        %p545 = pneg %p220
        %p546 = pneg %p244
        %p547 = pneg %p241
        %p548 = pneg %p265
        %p549 = pneg %p262
        %p550 = pneg %p286
        %p551 = pneg %p283
        %p552 = pneg %p307
        %p553 = pneg %p304
        %p554 = pneg %p328
        %p555 = pneg %p325
        %p556 = pneg %p349
        %p557 = pneg %p346
        %p558 = pneg %p370
        %p559 = pneg %p367
        %p560 = pneg %p391
        %p561 = pneg %p388
        %p562 = pneg %p412
        %p563 = pneg %p409
        %p564 = pneg %p438
        %p565 = pneg %p435
        %s566 = sand.u32 %s425, 1
        %s567 = scalar_lea.sflag [#allocation4], %s566
        %s568 = sand.u32 %s425, 1
        %s569 = smul.addr %s568, 64
        %s570 = scalar_lea.vmem [#allocation3], %s569
        %p571 = scmp.lt.s32.totalorder %s34, 1
        %s572 = scalar_select %p571, %s34, 1
        %s573 = smul.addr %s572, 8
        %s574 = smul.addr %s573, 8
        %s575 = scalar_lea.vmem %s0, %s574
        %v576 = vld [vmem:[%s575] sm:$0xff]
        %v577 = vld [vmem:[%s575 + $0x8] sm:$0xff]
        %v578 = vld [vmem:[%s575 + $0x10] sm:$0xff]
        %v579 = vld [vmem:[%s575 + $0x18] sm:$0xff]
        %v580 = vld [vmem:[%s575 + $0x20] sm:$0xff]
        %v581 = vld [vmem:[%s575 + $0x28] sm:$0xff]
        %v582 = vld [vmem:[%s575 + $0x30] sm:$0xff]
        %v583 = vld [vmem:[%s575 + $0x38] sm:$0xff]
        %v584 = vld [vmem:[%s1] sm:$0xff]
        %v585 = vld [vmem:[%s1 + $0x8] sm:$0xff]
        %v586 = vld [vmem:[%s1 + $0x10] sm:$0xff]
        %v587 = vld [vmem:[%s1 + $0x18] sm:$0xff]
        %v588 = vld [vmem:[%s1 + $0x20] sm:$0xff]
        %v589 = vld [vmem:[%s1 + $0x28] sm:$0xff]
        %v590 = vld [vmem:[%s1 + $0x30] sm:$0xff]
        %v591 = vld [vmem:[%s1 + $0x38] sm:$0xff]
        %vm592 = vcmask 523264
        %v594 = vsel %vm592, %v576, 0
        %v597 = vsel %vm592, %v577, 0
        %v600 = vsel %vm592, %v578, 0
        %v603 = vsel %vm592, %v579, 0
        %v606 = vsel %vm592, %v580, 0
        %v609 = vsel %vm592, %v581, 0
        %v612 = vsel %vm592, %v582, 0
        %v615 = vsel %vm592, %v583, 0
        %617 = vmatpush.msra.mxu0 0.0
        %618 = vmatpush.msra.mxu0 0.0
        %619 = vmatpush.msra.mxu0 0.0
        %620 = vmatpush.msra.mxu0 0.0
        %621 = vmatpush.msra.mxu0 0.0
        %622 = vmatpush.msra.mxu0 0.0
        %623 = vmatpush.msra.mxu0 0.0
        %624 = vmatpush.msra.mxu0 0.0
        %625 = vmatpush.msra.mxu0 %v591
        %626 = vmatpush.msra.mxu0 %v590
        %627 = vmatpush.msra.mxu0 %v589
        %628 = vmatpush.msra.mxu0 %v588
        %629 = vmatpush.msra.mxu0 %v587
        %630 = vmatpush.msra.mxu0 %v586
        %631 = vmatpush.msra.mxu0 %v585
        %632 = vmatpush.msra.mxu0 %v584
        %633 = vmatmul.f32.gmra.mxu0 %v594
        %v634 = vpop.f32.mrf.mxu0
        %v635 = vadd.f32 0.0, %v634
        %636 = vmatmul.f32.gmra.mxu0 %v597
        %v637 = vpop.f32.mrf.mxu0
        %v638 = vadd.f32 0.0, %v637
        %639 = vmatmul.f32.gmra.mxu0 %v600
        %v640 = vpop.f32.mrf.mxu0
        %v641 = vadd.f32 0.0, %v640
        %642 = vmatmul.f32.gmra.mxu0 %v603
        %v643 = vpop.f32.mrf.mxu0
        %v644 = vadd.f32 0.0, %v643
        %645 = vmatmul.f32.gmra.mxu0 %v606
        %v646 = vpop.f32.mrf.mxu0
        %v647 = vadd.f32 0.0, %v646
        %648 = vmatmul.f32.gmra.mxu0 %v609
        %v649 = vpop.f32.mrf.mxu0
        %v650 = vadd.f32 0.0, %v649
        %651 = vmatmul.f32.gmra.mxu0 %v612
        %v652 = vpop.f32.mrf.mxu0
        %v653 = vadd.f32 0.0, %v652
        %654 = vmatmul.f32.gmra.mxu0 %v615
        %v655 = vpop.f32.mrf.mxu0
        %v656 = vadd.f32 0.0, %v655
        %657 = vdwg.mxu0
        %v658 = vld [vmem:[%s2] sm:$0x1]
        %v660 = vperm.slane %v658, 0
        %v662 = vmul.f32 %v635, %v660
        %v663 = vmul.f32 %v638, %v660
        %v664 = vmul.f32 %v641, %v660
        %v665 = vmul.f32 %v644, %v660
        %v666 = vmul.f32 %v647, %v660
        %v667 = vmul.f32 %v650, %v660
        %v668 = vmul.f32 %v653, %v660
        %v669 = vmul.f32 %v656, %v660
        %v670 = vld [vmem:[%s3] sm:$0x1]
        %v672 = vperm.slane %v670, 0
        %v674 = vadd.f32 %v662, %v672
        %v675 = vadd.f32 %v663, %v672
        %v676 = vadd.f32 %v664, %v672
        %v677 = vadd.f32 %v665, %v672
        %v678 = vadd.f32 %v666, %v672
        %v679 = vadd.f32 %v667, %v672
        %v680 = vadd.f32 %v668, %v672
        %v681 = vadd.f32 %v669, %v672
        %v682 = vmax.f32 %v674, 0.0
        %v683 = vmax.f32 %v675, 0.0
        %v684 = vmax.f32 %v676, 0.0
        %v685 = vmax.f32 %v677, 0.0
        %v686 = vmax.f32 %v678, 0.0
        %v687 = vmax.f32 %v679, 0.0
        %v688 = vmax.f32 %v680, 0.0
        %v689 = vmax.f32 %v681, 0.0
        %v690 = vld [vmem:[%s5] sm:$0xff]
        %v691 = vld [vmem:[%s5 + $0x8] sm:$0xff]
        %vm692 = vcmask 130048
        %v694 = vsel %vm692, %v682, 0
        %v697 = vsel %vm692, %v683, 0
        %v700 = vsel %vm692, %v684, 0
        %v703 = vsel %vm692, %v685, 0
        %v706 = vsel %vm692, %v686, 0
        %v709 = vsel %vm692, %v687, 0
        %v712 = vsel %vm692, %v688, 0
        %v715 = vsel %vm692, %v689, 0
        %717 = vmatpush.msra.mxu0 0.0
        %718 = vmatpush.msra.mxu0 0.0
        %719 = vmatpush.msra.mxu0 0.0
        %720 = vmatpush.msra.mxu0 0.0
        %721 = vmatpush.msra.mxu0 0.0
        %722 = vmatpush.msra.mxu0 0.0
        %723 = vmatpush.msra.mxu0 0.0
        %724 = vmatpush.msra.mxu0 0.0
        %725 = vmatpush.msra.mxu0 0.0
        %726 = vmatpush.msra.mxu0 0.0
        %727 = vmatpush.msra.mxu0 0.0
        %728 = vmatpush.msra.mxu0 0.0
        %729 = vmatpush.msra.mxu0 0.0
        %730 = vmatpush.msra.mxu0 0.0
        %731 = vmatpush.msra.mxu0 %v691
        %732 = vmatpush.msra.mxu0 %v690
        %733 = vmatmul.f32.gmra.mxu0 %v694
        %v734 = vpop.f32.mrf.mxu0
        %v735 = vadd.f32 0.0, %v734
        %736 = vmatmul.f32.gmra.mxu0 %v697
        %v737 = vpop.f32.mrf.mxu0
        %v738 = vadd.f32 0.0, %v737
        %739 = vmatmul.f32.gmra.mxu0 %v700
        %v740 = vpop.f32.mrf.mxu0
        %v741 = vadd.f32 0.0, %v740
        %742 = vmatmul.f32.gmra.mxu0 %v703
        %v743 = vpop.f32.mrf.mxu0
        %v744 = vadd.f32 0.0, %v743
        %745 = vmatmul.f32.gmra.mxu0 %v706
        %v746 = vpop.f32.mrf.mxu0
        %v747 = vadd.f32 0.0, %v746
        %748 = vmatmul.f32.gmra.mxu0 %v709
        %v749 = vpop.f32.mrf.mxu0
        %v750 = vadd.f32 0.0, %v749
        %751 = vmatmul.f32.gmra.mxu0 %v712
        %v752 = vpop.f32.mrf.mxu0
        %v753 = vadd.f32 0.0, %v752
        %754 = vmatmul.f32.gmra.mxu0 %v715
        %v755 = vpop.f32.mrf.mxu0
        %v756 = vadd.f32 0.0, %v755
        %757 = vdwg.mxu0
        %v758 = vld [vmem:[%s4] sm:$0xff]
        %v759 = vld [vmem:[%s4 + $0x8] sm:$0xff]
        %v760 = vld [vmem:[%s4 + $0x10] sm:$0xff]
        %v761 = vld [vmem:[%s4 + $0x18] sm:$0xff]
        %v762 = vld [vmem:[%s4 + $0x20] sm:$0xff]
        %v763 = vld [vmem:[%s4 + $0x28] sm:$0xff]
        %v764 = vld [vmem:[%s4 + $0x30] sm:$0xff]
        %v765 = vld [vmem:[%s4 + $0x38] sm:$0xff]
        %s766 = scalar_lea.vmem %s5, 16
        %v767 = vld [vmem:[%s766] sm:$0xff]
        %v768 = vld [vmem:[%s766 + $0x8] sm:$0xff]
        %769 = vmatpush.msra.mxu0 0.0
        %770 = vmatpush.msra.mxu0 0.0
        %771 = vmatpush.msra.mxu0 0.0
        %772 = vmatpush.msra.mxu0 0.0
        %773 = vmatpush.msra.mxu0 0.0
        %774 = vmatpush.msra.mxu0 0.0
        %775 = vmatpush.msra.mxu0 0.0
        %776 = vmatpush.msra.mxu0 0.0
        %777 = vmatpush.msra.mxu0 0.0
        %778 = vmatpush.msra.mxu0 0.0
        %779 = vmatpush.msra.mxu0 0.0
        %780 = vmatpush.msra.mxu0 0.0
        %781 = vmatpush.msra.mxu0 0.0
        %782 = vmatpush.msra.mxu0 0.0
        %783 = vmatpush.msra.mxu0 %v768
        %784 = vmatpush.msra.mxu0 %v767
        %785 = vmatmul.f32.gmra.mxu0 %v694
        %v786 = vpop.f32.mrf.mxu0
        %v787 = vadd.f32 0.0, %v786
        %788 = vmatmul.f32.gmra.mxu0 %v697
        %v789 = vpop.f32.mrf.mxu0
        %v790 = vadd.f32 0.0, %v789
        %791 = vmatmul.f32.gmra.mxu0 %v700
        %v792 = vpop.f32.mrf.mxu0
        %v793 = vadd.f32 0.0, %v792
        %794 = vmatmul.f32.gmra.mxu0 %v703
        %v795 = vpop.f32.mrf.mxu0
        %v796 = vadd.f32 0.0, %v795
        %797 = vmatmul.f32.gmra.mxu0 %v706
        %v798 = vpop.f32.mrf.mxu0
        %v799 = vadd.f32 0.0, %v798
        %800 = vmatmul.f32.gmra.mxu0 %v709
        %v801 = vpop.f32.mrf.mxu0
        %v802 = vadd.f32 0.0, %v801
        %803 = vmatmul.f32.gmra.mxu0 %v712
        %v804 = vpop.f32.mrf.mxu0
        %v805 = vadd.f32 0.0, %v804
        %806 = vmatmul.f32.gmra.mxu0 %v715
        %v807 = vpop.f32.mrf.mxu0
        %v808 = vadd.f32 0.0, %v807
        %809 = vdwg.mxu0
        %s810 = scalar_lea.vmem %s4, 64
        %v811 = vld [vmem:[%s810] sm:$0xff]
        %v812 = vld [vmem:[%s810 + $0x8] sm:$0xff]
        %v813 = vld [vmem:[%s810 + $0x10] sm:$0xff]
        %v814 = vld [vmem:[%s810 + $0x18] sm:$0xff]
        %v815 = vld [vmem:[%s810 + $0x20] sm:$0xff]
        %v816 = vld [vmem:[%s810 + $0x28] sm:$0xff]
        %v817 = vld [vmem:[%s810 + $0x30] sm:$0xff]
        %v818 = vld [vmem:[%s810 + $0x38] sm:$0xff]
        %v820 = vsel %vm592, %v811, 0
        %v823 = vsel %vm592, %v812, 0
        %v826 = vsel %vm592, %v813, 0
        %v829 = vsel %vm592, %v814, 0
        %v832 = vsel %vm592, %v815, 0
        %v835 = vsel %vm592, %v816, 0
        %v838 = vsel %vm592, %v817, 0
        %v841 = vsel %vm592, %v818, 0
        %843 = vmatpush.msra.mxu0 0.0
        %844 = vmatpush.msra.mxu0 0.0
        %845 = vmatpush.msra.mxu0 0.0
        %846 = vmatpush.msra.mxu0 0.0
        %847 = vmatpush.msra.mxu0 0.0
        %848 = vmatpush.msra.mxu0 0.0
        %849 = vmatpush.msra.mxu0 0.0
        %850 = vmatpush.msra.mxu0 0.0
        %851 = vmatpush.msra.mxu0 %v808
        %852 = vmatpush.msra.mxu0 %v805
        %853 = vmatpush.msra.mxu0 %v802
        %854 = vmatpush.msra.mxu0 %v799
        %855 = vmatpush.msra.mxu0 %v796
        %856 = vmatpush.msra.mxu0 %v793
        %857 = vmatpush.msra.mxu0 %v790
        %858 = vmatpush.msra.mxu0 %v787
        %859 = vmatmul.f32.gmra.mxu0 %v820
        %v860 = vpop.f32.mrf.mxu0
        %v861 = vadd.f32 0.0, %v860
        %862 = vmatmul.f32.gmra.mxu0 %v823
        %v863 = vpop.f32.mrf.mxu0
        %v864 = vadd.f32 0.0, %v863
        %865 = vmatmul.f32.gmra.mxu0 %v826
        %v866 = vpop.f32.mrf.mxu0
        %v867 = vadd.f32 0.0, %v866
        %868 = vmatmul.f32.gmra.mxu0 %v829
        %v869 = vpop.f32.mrf.mxu0
        %v870 = vadd.f32 0.0, %v869
        %871 = vmatmul.f32.gmra.mxu0 %v832
        %v872 = vpop.f32.mrf.mxu0
        %v873 = vadd.f32 0.0, %v872
        %874 = vmatmul.f32.gmra.mxu0 %v835
        %v875 = vpop.f32.mrf.mxu0
        %v876 = vadd.f32 0.0, %v875
        %877 = vmatmul.f32.gmra.mxu0 %v838
        %v878 = vpop.f32.mrf.mxu0
        %v879 = vadd.f32 0.0, %v878
        %880 = vmatmul.f32.gmra.mxu0 %v841
        %v881 = vpop.f32.mrf.mxu0
        %v882 = vadd.f32 0.0, %v881
        %883 = vdwg.mxu0
        %v885 = vsel %vm592, %v758, 0
        %v888 = vsel %vm592, %v759, 0
        %v891 = vsel %vm592, %v760, 0
        %v894 = vsel %vm592, %v761, 0
        %v897 = vsel %vm592, %v762, 0
        %v900 = vsel %vm592, %v763, 0
        %v903 = vsel %vm592, %v764, 0
        %v906 = vsel %vm592, %v765, 0
        %908 = vmatpush.msra.mxu0 0.0
        %909 = vmatpush.msra.mxu0 0.0
        %910 = vmatpush.msra.mxu0 0.0
        %911 = vmatpush.msra.mxu0 0.0
        %912 = vmatpush.msra.mxu0 0.0
        %913 = vmatpush.msra.mxu0 0.0
        %914 = vmatpush.msra.mxu0 0.0
        %915 = vmatpush.msra.mxu0 0.0
        %916 = vmatpush.msra.mxu0 %v756
        %917 = vmatpush.msra.mxu0 %v753
        %918 = vmatpush.msra.mxu0 %v750
        %919 = vmatpush.msra.mxu0 %v747
        %920 = vmatpush.msra.mxu0 %v744
        %921 = vmatpush.msra.mxu0 %v741
        %922 = vmatpush.msra.mxu0 %v738
        %923 = vmatpush.msra.mxu0 %v735
        %924 = vmatmul.f32.gmra.mxu0 %v885
        %v925 = vpop.f32.mrf.mxu0
        %v926 = vadd.f32 %v861, %v925
        %927 = vmatmul.f32.gmra.mxu0 %v888
        %v928 = vpop.f32.mrf.mxu0
        %v929 = vadd.f32 %v864, %v928
        %930 = vmatmul.f32.gmra.mxu0 %v891
        %v931 = vpop.f32.mrf.mxu0
        %v932 = vadd.f32 %v867, %v931
        %933 = vmatmul.f32.gmra.mxu0 %v894
        %v934 = vpop.f32.mrf.mxu0
        %v935 = vadd.f32 %v870, %v934
        %936 = vmatmul.f32.gmra.mxu0 %v897
        %v937 = vpop.f32.mrf.mxu0
        %v938 = vadd.f32 %v873, %v937
        %939 = vmatmul.f32.gmra.mxu0 %v900
        %v940 = vpop.f32.mrf.mxu0
        %v941 = vadd.f32 %v876, %v940
        %942 = vmatmul.f32.gmra.mxu0 %v903
        %v943 = vpop.f32.mrf.mxu0
        %v944 = vadd.f32 %v879, %v943
        %945 = vmatmul.f32.gmra.mxu0 %v906
        %v946 = vpop.f32.mrf.mxu0
        %v947 = vadd.f32 %v882, %v946
        %948 = vdwg.mxu0
        %s949 = scalar_lea.vmem %s5, 32
        %v950 = vld [vmem:[%s949] sm:$0xff]
        %v951 = vld [vmem:[%s949 + $0x8] sm:$0xff]
        %952 = vmatpush.msra.mxu0 0.0
        %953 = vmatpush.msra.mxu0 0.0
        %954 = vmatpush.msra.mxu0 0.0
        %955 = vmatpush.msra.mxu0 0.0
        %956 = vmatpush.msra.mxu0 0.0
        %957 = vmatpush.msra.mxu0 0.0
        %958 = vmatpush.msra.mxu0 0.0
        %959 = vmatpush.msra.mxu0 0.0
        %960 = vmatpush.msra.mxu0 0.0
        %961 = vmatpush.msra.mxu0 0.0
        %962 = vmatpush.msra.mxu0 0.0
        %963 = vmatpush.msra.mxu0 0.0
        %964 = vmatpush.msra.mxu0 0.0
        %965 = vmatpush.msra.mxu0 0.0
        %966 = vmatpush.msra.mxu0 %v951
        %967 = vmatpush.msra.mxu0 %v950
        %968 = vmatmul.f32.gmra.mxu0 %v694
        %v969 = vpop.f32.mrf.mxu0
        %v970 = vadd.f32 0.0, %v969
        %971 = vmatmul.f32.gmra.mxu0 %v697
        %v972 = vpop.f32.mrf.mxu0
        %v973 = vadd.f32 0.0, %v972
        %974 = vmatmul.f32.gmra.mxu0 %v700
        %v975 = vpop.f32.mrf.mxu0
        %v976 = vadd.f32 0.0, %v975
        %977 = vmatmul.f32.gmra.mxu0 %v703
        %v978 = vpop.f32.mrf.mxu0
        %v979 = vadd.f32 0.0, %v978
        %980 = vmatmul.f32.gmra.mxu0 %v706
        %v981 = vpop.f32.mrf.mxu0
        %v982 = vadd.f32 0.0, %v981
        %983 = vmatmul.f32.gmra.mxu0 %v709
        %v984 = vpop.f32.mrf.mxu0
        %v985 = vadd.f32 0.0, %v984
        %986 = vmatmul.f32.gmra.mxu0 %v712
        %v987 = vpop.f32.mrf.mxu0
        %v988 = vadd.f32 0.0, %v987
        %989 = vmatmul.f32.gmra.mxu0 %v715
        %v990 = vpop.f32.mrf.mxu0
        %v991 = vadd.f32 0.0, %v990
        %992 = vdwg.mxu0
        %s993 = scalar_lea.vmem %s4, 128
        %v994 = vld [vmem:[%s993] sm:$0xff]
        %v995 = vld [vmem:[%s993 + $0x8] sm:$0xff]
        %v996 = vld [vmem:[%s993 + $0x10] sm:$0xff]
        %v997 = vld [vmem:[%s993 + $0x18] sm:$0xff]
        %v998 = vld [vmem:[%s993 + $0x20] sm:$0xff]
        %v999 = vld [vmem:[%s993 + $0x28] sm:$0xff]
        %v1000 = vld [vmem:[%s993 + $0x30] sm:$0xff]
        %v1001 = vld [vmem:[%s993 + $0x38] sm:$0xff]
        %v1003 = vsel %vm592, %v994, 0
        %v1006 = vsel %vm592, %v995, 0
        %v1009 = vsel %vm592, %v996, 0
        %v1012 = vsel %vm592, %v997, 0
        %v1015 = vsel %vm592, %v998, 0
        %v1018 = vsel %vm592, %v999, 0
        %v1021 = vsel %vm592, %v1000, 0
        %v1024 = vsel %vm592, %v1001, 0
        %1026 = vmatpush.msra.mxu0 0.0
        %1027 = vmatpush.msra.mxu0 0.0
        %1028 = vmatpush.msra.mxu0 0.0
        %1029 = vmatpush.msra.mxu0 0.0
        %1030 = vmatpush.msra.mxu0 0.0
        %1031 = vmatpush.msra.mxu0 0.0
        %1032 = vmatpush.msra.mxu0 0.0
        %1033 = vmatpush.msra.mxu0 0.0
        %1034 = vmatpush.msra.mxu0 %v991
        %1035 = vmatpush.msra.mxu0 %v988
        %1036 = vmatpush.msra.mxu0 %v985
        %1037 = vmatpush.msra.mxu0 %v982
        %1038 = vmatpush.msra.mxu0 %v979
        %1039 = vmatpush.msra.mxu0 %v976
        %1040 = vmatpush.msra.mxu0 %v973
        %1041 = vmatpush.msra.mxu0 %v970
        %1042 = vmatmul.f32.gmra.mxu0 %v1003
        %v1043 = vpop.f32.mrf.mxu0
        %v1044 = vadd.f32 0.0, %v1043
        %1045 = vmatmul.f32.gmra.mxu0 %v1006
        %v1046 = vpop.f32.mrf.mxu0
        %v1047 = vadd.f32 0.0, %v1046
        %1048 = vmatmul.f32.gmra.mxu0 %v1009
        %v1049 = vpop.f32.mrf.mxu0
        %v1050 = vadd.f32 0.0, %v1049
        %1051 = vmatmul.f32.gmra.mxu0 %v1012
        %v1052 = vpop.f32.mrf.mxu0
        %v1053 = vadd.f32 0.0, %v1052
        %1054 = vmatmul.f32.gmra.mxu0 %v1015
        %v1055 = vpop.f32.mrf.mxu0
        %v1056 = vadd.f32 0.0, %v1055
        %1057 = vmatmul.f32.gmra.mxu0 %v1018
        %v1058 = vpop.f32.mrf.mxu0
        %v1059 = vadd.f32 0.0, %v1058
        %1060 = vmatmul.f32.gmra.mxu0 %v1021
        %v1061 = vpop.f32.mrf.mxu0
        %v1062 = vadd.f32 0.0, %v1061
        %1063 = vmatmul.f32.gmra.mxu0 %v1024
        %v1064 = vpop.f32.mrf.mxu0
        %v1065 = vadd.f32 0.0, %v1064
        %1066 = vdwg.mxu0
        %v1067 = vadd.f32 %v926, %v1044
        %v1068 = vadd.f32 %v929, %v1047
        %v1069 = vadd.f32 %v932, %v1050
        %v1070 = vadd.f32 %v935, %v1053
        %v1071 = vadd.f32 %v938, %v1056
        %v1072 = vadd.f32 %v941, %v1059
        %v1073 = vadd.f32 %v944, %v1062
        %v1074 = vadd.f32 %v947, %v1065
        %s1075 = scalar_lea.vmem %s5, 48
        %v1076 = vld [vmem:[%s1075] sm:$0xff]
        %v1077 = vld [vmem:[%s1075 + $0x8] sm:$0xff]
        %1078 = vmatpush.msra.mxu0 0.0
        %1079 = vmatpush.msra.mxu0 0.0
        %1080 = vmatpush.msra.mxu0 0.0
        %1081 = vmatpush.msra.mxu0 0.0
        %1082 = vmatpush.msra.mxu0 0.0
        %1083 = vmatpush.msra.mxu0 0.0
        %1084 = vmatpush.msra.mxu0 0.0
        %1085 = vmatpush.msra.mxu0 0.0
        %1086 = vmatpush.msra.mxu0 0.0
        %1087 = vmatpush.msra.mxu0 0.0
        %1088 = vmatpush.msra.mxu0 0.0
        %1089 = vmatpush.msra.mxu0 0.0
        %1090 = vmatpush.msra.mxu0 0.0
        %1091 = vmatpush.msra.mxu0 0.0
        %1092 = vmatpush.msra.mxu0 %v1077
        %1093 = vmatpush.msra.mxu0 %v1076
        %1094 = vmatmul.f32.gmra.mxu0 %v694
        %v1095 = vpop.f32.mrf.mxu0
        %v1096 = vadd.f32 0.0, %v1095
        %1097 = vmatmul.f32.gmra.mxu0 %v697
        %v1098 = vpop.f32.mrf.mxu0
        %v1099 = vadd.f32 0.0, %v1098
        %1100 = vmatmul.f32.gmra.mxu0 %v700
        %v1101 = vpop.f32.mrf.mxu0
        %v1102 = vadd.f32 0.0, %v1101
        %1103 = vmatmul.f32.gmra.mxu0 %v703
        %v1104 = vpop.f32.mrf.mxu0
        %v1105 = vadd.f32 0.0, %v1104
        %1106 = vmatmul.f32.gmra.mxu0 %v706
        %v1107 = vpop.f32.mrf.mxu0
        %v1108 = vadd.f32 0.0, %v1107
        %1109 = vmatmul.f32.gmra.mxu0 %v709
        %v1110 = vpop.f32.mrf.mxu0
        %v1111 = vadd.f32 0.0, %v1110
        %1112 = vmatmul.f32.gmra.mxu0 %v712
        %v1113 = vpop.f32.mrf.mxu0
        %v1114 = vadd.f32 0.0, %v1113
        %1115 = vmatmul.f32.gmra.mxu0 %v715
        %v1116 = vpop.f32.mrf.mxu0
        %v1117 = vadd.f32 0.0, %v1116
        %1118 = vdwg.mxu0
        %s1119 = scalar_lea.vmem %s4, 192
        %v1120 = vld [vmem:[%s1119] sm:$0xff]
        %v1121 = vld [vmem:[%s1119 + $0x8] sm:$0xff]
        %v1122 = vld [vmem:[%s1119 + $0x10] sm:$0xff]
        %v1123 = vld [vmem:[%s1119 + $0x18] sm:$0xff]
        %v1124 = vld [vmem:[%s1119 + $0x20] sm:$0xff]
        %v1125 = vld [vmem:[%s1119 + $0x28] sm:$0xff]
        %v1126 = vld [vmem:[%s1119 + $0x30] sm:$0xff]
        %v1127 = vld [vmem:[%s1119 + $0x38] sm:$0xff]
        %v1129 = vsel %vm592, %v1120, 0
        %v1132 = vsel %vm592, %v1121, 0
        %v1135 = vsel %vm592, %v1122, 0
        %v1138 = vsel %vm592, %v1123, 0
        %v1141 = vsel %vm592, %v1124, 0
        %v1144 = vsel %vm592, %v1125, 0
        %v1147 = vsel %vm592, %v1126, 0
        %v1150 = vsel %vm592, %v1127, 0
        %1152 = vmatpush.msra.mxu0 0.0
        %1153 = vmatpush.msra.mxu0 0.0
        %1154 = vmatpush.msra.mxu0 0.0
        %1155 = vmatpush.msra.mxu0 0.0
        %1156 = vmatpush.msra.mxu0 0.0
        %1157 = vmatpush.msra.mxu0 0.0
        %1158 = vmatpush.msra.mxu0 0.0
        %1159 = vmatpush.msra.mxu0 0.0
        %1160 = vmatpush.msra.mxu0 %v1117
        %1161 = vmatpush.msra.mxu0 %v1114
        %1162 = vmatpush.msra.mxu0 %v1111
        %1163 = vmatpush.msra.mxu0 %v1108
        %1164 = vmatpush.msra.mxu0 %v1105
        %1165 = vmatpush.msra.mxu0 %v1102
        %1166 = vmatpush.msra.mxu0 %v1099
        %1167 = vmatpush.msra.mxu0 %v1096
        %1168 = vmatmul.f32.gmra.mxu0 %v1129
        %v1169 = vpop.f32.mrf.mxu0
        %v1170 = vadd.f32 0.0, %v1169
        %1171 = vmatmul.f32.gmra.mxu0 %v1132
        %v1172 = vpop.f32.mrf.mxu0
        %v1173 = vadd.f32 0.0, %v1172
        %1174 = vmatmul.f32.gmra.mxu0 %v1135
        %v1175 = vpop.f32.mrf.mxu0
        %v1176 = vadd.f32 0.0, %v1175
        %1177 = vmatmul.f32.gmra.mxu0 %v1138
        %v1178 = vpop.f32.mrf.mxu0
        %v1179 = vadd.f32 0.0, %v1178
        %1180 = vmatmul.f32.gmra.mxu0 %v1141
        %v1181 = vpop.f32.mrf.mxu0
        %v1182 = vadd.f32 0.0, %v1181
        %1183 = vmatmul.f32.gmra.mxu0 %v1144
        %v1184 = vpop.f32.mrf.mxu0
        %v1185 = vadd.f32 0.0, %v1184
        %1186 = vmatmul.f32.gmra.mxu0 %v1147
        %v1187 = vpop.f32.mrf.mxu0
        %v1188 = vadd.f32 0.0, %v1187
        %1189 = vmatmul.f32.gmra.mxu0 %v1150
        %v1190 = vpop.f32.mrf.mxu0
        %v1191 = vadd.f32 0.0, %v1190
        %1192 = vdwg.mxu0
        %v1193 = vadd.f32 %v1067, %v1170
        %v1194 = vadd.f32 %v1068, %v1173
        %v1195 = vadd.f32 %v1069, %v1176
        %v1196 = vadd.f32 %v1070, %v1179
        %v1197 = vadd.f32 %v1071, %v1182
        %v1198 = vadd.f32 %v1072, %v1185
        %v1199 = vadd.f32 %v1073, %v1188
        %v1200 = vadd.f32 %v1074, %v1191
        %s1201 = scalar_lea.vmem %s5, 64
        %v1202 = vld [vmem:[%s1201] sm:$0xff]
        %v1203 = vld [vmem:[%s1201 + $0x8] sm:$0xff]
        %1204 = vmatpush.msra.mxu0 0.0
        %1205 = vmatpush.msra.mxu0 0.0
        %1206 = vmatpush.msra.mxu0 0.0
        %1207 = vmatpush.msra.mxu0 0.0
        %1208 = vmatpush.msra.mxu0 0.0
        %1209 = vmatpush.msra.mxu0 0.0
        %1210 = vmatpush.msra.mxu0 0.0
        %1211 = vmatpush.msra.mxu0 0.0
        %1212 = vmatpush.msra.mxu0 0.0
        %1213 = vmatpush.msra.mxu0 0.0
        %1214 = vmatpush.msra.mxu0 0.0
        %1215 = vmatpush.msra.mxu0 0.0
        %1216 = vmatpush.msra.mxu0 0.0
        %1217 = vmatpush.msra.mxu0 0.0
        %1218 = vmatpush.msra.mxu0 %v1203
        %1219 = vmatpush.msra.mxu0 %v1202
        %1220 = vmatmul.f32.gmra.mxu0 %v694
        %v1221 = vpop.f32.mrf.mxu0
        %v1222 = vadd.f32 0.0, %v1221
        %1223 = vmatmul.f32.gmra.mxu0 %v697
        %v1224 = vpop.f32.mrf.mxu0
        %v1225 = vadd.f32 0.0, %v1224
        %1226 = vmatmul.f32.gmra.mxu0 %v700
        %v1227 = vpop.f32.mrf.mxu0
        %v1228 = vadd.f32 0.0, %v1227
        %1229 = vmatmul.f32.gmra.mxu0 %v703
        %v1230 = vpop.f32.mrf.mxu0
        %v1231 = vadd.f32 0.0, %v1230
        %1232 = vmatmul.f32.gmra.mxu0 %v706
        %v1233 = vpop.f32.mrf.mxu0
        %v1234 = vadd.f32 0.0, %v1233
        %1235 = vmatmul.f32.gmra.mxu0 %v709
        %v1236 = vpop.f32.mrf.mxu0
        %v1237 = vadd.f32 0.0, %v1236
        %1238 = vmatmul.f32.gmra.mxu0 %v712
        %v1239 = vpop.f32.mrf.mxu0
        %v1240 = vadd.f32 0.0, %v1239
        %1241 = vmatmul.f32.gmra.mxu0 %v715
        %v1242 = vpop.f32.mrf.mxu0
        %v1243 = vadd.f32 0.0, %v1242
        %1244 = vdwg.mxu0
        %s1245 = scalar_lea.vmem %s4, 256
        %v1246 = vld [vmem:[%s1245] sm:$0xff]
        %v1247 = vld [vmem:[%s1245 + $0x8] sm:$0xff]
        %v1248 = vld [vmem:[%s1245 + $0x10] sm:$0xff]
        %v1249 = vld [vmem:[%s1245 + $0x18] sm:$0xff]
        %v1250 = vld [vmem:[%s1245 + $0x20] sm:$0xff]
        %v1251 = vld [vmem:[%s1245 + $0x28] sm:$0xff]
        %v1252 = vld [vmem:[%s1245 + $0x30] sm:$0xff]
        %v1253 = vld [vmem:[%s1245 + $0x38] sm:$0xff]
        %v1255 = vsel %vm592, %v1246, 0
        %v1258 = vsel %vm592, %v1247, 0
        %v1261 = vsel %vm592, %v1248, 0
        %v1264 = vsel %vm592, %v1249, 0
        %v1267 = vsel %vm592, %v1250, 0
        %v1270 = vsel %vm592, %v1251, 0
        %v1273 = vsel %vm592, %v1252, 0
        %v1276 = vsel %vm592, %v1253, 0
        %1278 = vmatpush.msra.mxu0 0.0
        %1279 = vmatpush.msra.mxu0 0.0
        %1280 = vmatpush.msra.mxu0 0.0
        %1281 = vmatpush.msra.mxu0 0.0
        %1282 = vmatpush.msra.mxu0 0.0
        %1283 = vmatpush.msra.mxu0 0.0
        %1284 = vmatpush.msra.mxu0 0.0
        %1285 = vmatpush.msra.mxu0 0.0
        %1286 = vmatpush.msra.mxu0 %v1243
        %1287 = vmatpush.msra.mxu0 %v1240
        %1288 = vmatpush.msra.mxu0 %v1237
        %1289 = vmatpush.msra.mxu0 %v1234
        %1290 = vmatpush.msra.mxu0 %v1231
        %1291 = vmatpush.msra.mxu0 %v1228
        %1292 = vmatpush.msra.mxu0 %v1225
        %1293 = vmatpush.msra.mxu0 %v1222
        %1294 = vmatmul.f32.gmra.mxu0 %v1255
        %v1295 = vpop.f32.mrf.mxu0
        %v1296 = vadd.f32 0.0, %v1295
        %1297 = vmatmul.f32.gmra.mxu0 %v1258
        %v1298 = vpop.f32.mrf.mxu0
        %v1299 = vadd.f32 0.0, %v1298
        %1300 = vmatmul.f32.gmra.mxu0 %v1261
        %v1301 = vpop.f32.mrf.mxu0
        %v1302 = vadd.f32 0.0, %v1301
        %1303 = vmatmul.f32.gmra.mxu0 %v1264
        %v1304 = vpop.f32.mrf.mxu0
        %v1305 = vadd.f32 0.0, %v1304
        %1306 = vmatmul.f32.gmra.mxu0 %v1267
        %v1307 = vpop.f32.mrf.mxu0
        %v1308 = vadd.f32 0.0, %v1307
        %1309 = vmatmul.f32.gmra.mxu0 %v1270
        %v1310 = vpop.f32.mrf.mxu0
        %v1311 = vadd.f32 0.0, %v1310
        %1312 = vmatmul.f32.gmra.mxu0 %v1273
        %v1313 = vpop.f32.mrf.mxu0
        %v1314 = vadd.f32 0.0, %v1313
        %1315 = vmatmul.f32.gmra.mxu0 %v1276
        %v1316 = vpop.f32.mrf.mxu0
        %v1317 = vadd.f32 0.0, %v1316
        %1318 = vdwg.mxu0
        %v1319 = vadd.f32 %v1193, %v1296
        %v1320 = vadd.f32 %v1194, %v1299
        %v1321 = vadd.f32 %v1195, %v1302
        %v1322 = vadd.f32 %v1196, %v1305
        %v1323 = vadd.f32 %v1197, %v1308
        %v1324 = vadd.f32 %v1198, %v1311
        %v1325 = vadd.f32 %v1199, %v1314
        %v1326 = vadd.f32 %v1200, %v1317
        %s1327 = scalar_lea.vmem %s5, 80
        %v1328 = vld [vmem:[%s1327] sm:$0xff]
        %v1329 = vld [vmem:[%s1327 + $0x8] sm:$0xff]
        %1330 = vmatpush.msra.mxu0 0.0
        %1331 = vmatpush.msra.mxu0 0.0
        %1332 = vmatpush.msra.mxu0 0.0
        %1333 = vmatpush.msra.mxu0 0.0
        %1334 = vmatpush.msra.mxu0 0.0
        %1335 = vmatpush.msra.mxu0 0.0
        %1336 = vmatpush.msra.mxu0 0.0
        %1337 = vmatpush.msra.mxu0 0.0
        %1338 = vmatpush.msra.mxu0 0.0
        %1339 = vmatpush.msra.mxu0 0.0
        %1340 = vmatpush.msra.mxu0 0.0
        %1341 = vmatpush.msra.mxu0 0.0
        %1342 = vmatpush.msra.mxu0 0.0
        %1343 = vmatpush.msra.mxu0 0.0
        %1344 = vmatpush.msra.mxu0 %v1329
        %1345 = vmatpush.msra.mxu0 %v1328
        %1346 = vmatmul.f32.gmra.mxu0 %v694
        %v1347 = vpop.f32.mrf.mxu0
        %v1348 = vadd.f32 0.0, %v1347
        %1349 = vmatmul.f32.gmra.mxu0 %v697
        %v1350 = vpop.f32.mrf.mxu0
        %v1351 = vadd.f32 0.0, %v1350
        %1352 = vmatmul.f32.gmra.mxu0 %v700
        %v1353 = vpop.f32.mrf.mxu0
        %v1354 = vadd.f32 0.0, %v1353
        %1355 = vmatmul.f32.gmra.mxu0 %v703
        %v1356 = vpop.f32.mrf.mxu0
        %v1357 = vadd.f32 0.0, %v1356
        %1358 = vmatmul.f32.gmra.mxu0 %v706
        %v1359 = vpop.f32.mrf.mxu0
        %v1360 = vadd.f32 0.0, %v1359
        %1361 = vmatmul.f32.gmra.mxu0 %v709
        %v1362 = vpop.f32.mrf.mxu0
        %v1363 = vadd.f32 0.0, %v1362
        %1364 = vmatmul.f32.gmra.mxu0 %v712
        %v1365 = vpop.f32.mrf.mxu0
        %v1366 = vadd.f32 0.0, %v1365
        %1367 = vmatmul.f32.gmra.mxu0 %v715
        %v1368 = vpop.f32.mrf.mxu0
        %v1369 = vadd.f32 0.0, %v1368
        %1370 = vdwg.mxu0
        %s1371 = scalar_lea.vmem %s4, 320
        %v1372 = vld [vmem:[%s1371] sm:$0xff]
        %v1373 = vld [vmem:[%s1371 + $0x8] sm:$0xff]
        %v1374 = vld [vmem:[%s1371 + $0x10] sm:$0xff]
        %v1375 = vld [vmem:[%s1371 + $0x18] sm:$0xff]
        %v1376 = vld [vmem:[%s1371 + $0x20] sm:$0xff]
        %v1377 = vld [vmem:[%s1371 + $0x28] sm:$0xff]
        %v1378 = vld [vmem:[%s1371 + $0x30] sm:$0xff]
        %v1379 = vld [vmem:[%s1371 + $0x38] sm:$0xff]
        %v1381 = vsel %vm592, %v1372, 0
        %v1384 = vsel %vm592, %v1373, 0
        %v1387 = vsel %vm592, %v1374, 0
        %v1390 = vsel %vm592, %v1375, 0
        %v1393 = vsel %vm592, %v1376, 0
        %v1396 = vsel %vm592, %v1377, 0
        %v1399 = vsel %vm592, %v1378, 0
        %v1402 = vsel %vm592, %v1379, 0
        %1404 = vmatpush.msra.mxu0 0.0
        %1405 = vmatpush.msra.mxu0 0.0
        %1406 = vmatpush.msra.mxu0 0.0
        %1407 = vmatpush.msra.mxu0 0.0
        %1408 = vmatpush.msra.mxu0 0.0
        %1409 = vmatpush.msra.mxu0 0.0
        %1410 = vmatpush.msra.mxu0 0.0
        %1411 = vmatpush.msra.mxu0 0.0
        %1412 = vmatpush.msra.mxu0 %v1369
        %1413 = vmatpush.msra.mxu0 %v1366
        %1414 = vmatpush.msra.mxu0 %v1363
        %1415 = vmatpush.msra.mxu0 %v1360
        %1416 = vmatpush.msra.mxu0 %v1357
        %1417 = vmatpush.msra.mxu0 %v1354
        %1418 = vmatpush.msra.mxu0 %v1351
        %1419 = vmatpush.msra.mxu0 %v1348
        %1420 = vmatmul.f32.gmra.mxu0 %v1381
        %v1421 = vpop.f32.mrf.mxu0
        %v1422 = vadd.f32 0.0, %v1421
        %1423 = vmatmul.f32.gmra.mxu0 %v1384
        %v1424 = vpop.f32.mrf.mxu0
        %v1425 = vadd.f32 0.0, %v1424
        %1426 = vmatmul.f32.gmra.mxu0 %v1387
        %v1427 = vpop.f32.mrf.mxu0
        %v1428 = vadd.f32 0.0, %v1427
        %1429 = vmatmul.f32.gmra.mxu0 %v1390
        %v1430 = vpop.f32.mrf.mxu0
        %v1431 = vadd.f32 0.0, %v1430
        %1432 = vmatmul.f32.gmra.mxu0 %v1393
        %v1433 = vpop.f32.mrf.mxu0
        %v1434 = vadd.f32 0.0, %v1433
        %1435 = vmatmul.f32.gmra.mxu0 %v1396
        %v1436 = vpop.f32.mrf.mxu0
        %v1437 = vadd.f32 0.0, %v1436
        %1438 = vmatmul.f32.gmra.mxu0 %v1399
        %v1439 = vpop.f32.mrf.mxu0
        %v1440 = vadd.f32 0.0, %v1439
        %1441 = vmatmul.f32.gmra.mxu0 %v1402
        %v1442 = vpop.f32.mrf.mxu0
        %v1443 = vadd.f32 0.0, %v1442
        %1444 = vdwg.mxu0
        %v1445 = vadd.f32 %v1319, %v1422
        %v1446 = vadd.f32 %v1320, %v1425
        %v1447 = vadd.f32 %v1321, %v1428
        %v1448 = vadd.f32 %v1322, %v1431
        %v1449 = vadd.f32 %v1323, %v1434
        %v1450 = vadd.f32 %v1324, %v1437
        %v1451 = vadd.f32 %v1325, %v1440
        %v1452 = vadd.f32 %v1326, %v1443
        %s1453 = scalar_lea.vmem %s5, 96
        %v1454 = vld [vmem:[%s1453] sm:$0xff]
        %v1455 = vld [vmem:[%s1453 + $0x8] sm:$0xff]
        %1456 = vmatpush.msra.mxu0 0.0
        %1457 = vmatpush.msra.mxu0 0.0
        %1458 = vmatpush.msra.mxu0 0.0
        %1459 = vmatpush.msra.mxu0 0.0
        %1460 = vmatpush.msra.mxu0 0.0
        %1461 = vmatpush.msra.mxu0 0.0
        %1462 = vmatpush.msra.mxu0 0.0
        %1463 = vmatpush.msra.mxu0 0.0
        %1464 = vmatpush.msra.mxu0 0.0
        %1465 = vmatpush.msra.mxu0 0.0
        %1466 = vmatpush.msra.mxu0 0.0
        %1467 = vmatpush.msra.mxu0 0.0
        %1468 = vmatpush.msra.mxu0 0.0
        %1469 = vmatpush.msra.mxu0 0.0
        %1470 = vmatpush.msra.mxu0 %v1455
        %1471 = vmatpush.msra.mxu0 %v1454
        %1472 = vmatmul.f32.gmra.mxu0 %v694
        %v1473 = vpop.f32.mrf.mxu0
        %v1474 = vadd.f32 0.0, %v1473
        %1475 = vmatmul.f32.gmra.mxu0 %v697
        %v1476 = vpop.f32.mrf.mxu0
        %v1477 = vadd.f32 0.0, %v1476
        %1478 = vmatmul.f32.gmra.mxu0 %v700
        %v1479 = vpop.f32.mrf.mxu0
        %v1480 = vadd.f32 0.0, %v1479
        %1481 = vmatmul.f32.gmra.mxu0 %v703
        %v1482 = vpop.f32.mrf.mxu0
        %v1483 = vadd.f32 0.0, %v1482
        %1484 = vmatmul.f32.gmra.mxu0 %v706
        %v1485 = vpop.f32.mrf.mxu0
        %v1486 = vadd.f32 0.0, %v1485
        %1487 = vmatmul.f32.gmra.mxu0 %v709
        %v1488 = vpop.f32.mrf.mxu0
        %v1489 = vadd.f32 0.0, %v1488
        %1490 = vmatmul.f32.gmra.mxu0 %v712
        %v1491 = vpop.f32.mrf.mxu0
        %v1492 = vadd.f32 0.0, %v1491
        %1493 = vmatmul.f32.gmra.mxu0 %v715
        %v1494 = vpop.f32.mrf.mxu0
        %v1495 = vadd.f32 0.0, %v1494
        %1496 = vdwg.mxu0
        %s1497 = scalar_lea.vmem %s4, 384
        %v1498 = vld [vmem:[%s1497] sm:$0xff]
        %v1499 = vld [vmem:[%s1497 + $0x8] sm:$0xff]
        %v1500 = vld [vmem:[%s1497 + $0x10] sm:$0xff]
        %v1501 = vld [vmem:[%s1497 + $0x18] sm:$0xff]
        %v1502 = vld [vmem:[%s1497 + $0x20] sm:$0xff]
        %v1503 = vld [vmem:[%s1497 + $0x28] sm:$0xff]
        %v1504 = vld [vmem:[%s1497 + $0x30] sm:$0xff]
        %v1505 = vld [vmem:[%s1497 + $0x38] sm:$0xff]
        %v1507 = vsel %vm592, %v1498, 0
        %v1510 = vsel %vm592, %v1499, 0
        %v1513 = vsel %vm592, %v1500, 0
        %v1516 = vsel %vm592, %v1501, 0
        %v1519 = vsel %vm592, %v1502, 0
        %v1522 = vsel %vm592, %v1503, 0
        %v1525 = vsel %vm592, %v1504, 0
        %v1528 = vsel %vm592, %v1505, 0
        %1530 = vmatpush.msra.mxu0 0.0
        %1531 = vmatpush.msra.mxu0 0.0
        %1532 = vmatpush.msra.mxu0 0.0
        %1533 = vmatpush.msra.mxu0 0.0
        %1534 = vmatpush.msra.mxu0 0.0
        %1535 = vmatpush.msra.mxu0 0.0
        %1536 = vmatpush.msra.mxu0 0.0
        %1537 = vmatpush.msra.mxu0 0.0
        %1538 = vmatpush.msra.mxu0 %v1495
        %1539 = vmatpush.msra.mxu0 %v1492
        %1540 = vmatpush.msra.mxu0 %v1489
        %1541 = vmatpush.msra.mxu0 %v1486
        %1542 = vmatpush.msra.mxu0 %v1483
        %1543 = vmatpush.msra.mxu0 %v1480
        %1544 = vmatpush.msra.mxu0 %v1477
        %1545 = vmatpush.msra.mxu0 %v1474
        %1546 = vmatmul.f32.gmra.mxu0 %v1507
        %v1547 = vpop.f32.mrf.mxu0
        %v1548 = vadd.f32 0.0, %v1547
        %1549 = vmatmul.f32.gmra.mxu0 %v1510
        %v1550 = vpop.f32.mrf.mxu0
        %v1551 = vadd.f32 0.0, %v1550
        %1552 = vmatmul.f32.gmra.mxu0 %v1513
        %v1553 = vpop.f32.mrf.mxu0
        %v1554 = vadd.f32 0.0, %v1553
        %1555 = vmatmul.f32.gmra.mxu0 %v1516
        %v1556 = vpop.f32.mrf.mxu0
        %v1557 = vadd.f32 0.0, %v1556
        %1558 = vmatmul.f32.gmra.mxu0 %v1519
        %v1559 = vpop.f32.mrf.mxu0
        %v1560 = vadd.f32 0.0, %v1559
        %1561 = vmatmul.f32.gmra.mxu0 %v1522
        %v1562 = vpop.f32.mrf.mxu0
        %v1563 = vadd.f32 0.0, %v1562
        %1564 = vmatmul.f32.gmra.mxu0 %v1525
        %v1565 = vpop.f32.mrf.mxu0
        %v1566 = vadd.f32 0.0, %v1565
        %1567 = vmatmul.f32.gmra.mxu0 %v1528
        %v1568 = vpop.f32.mrf.mxu0
        %v1569 = vadd.f32 0.0, %v1568
        %1570 = vdwg.mxu0
        %v1571 = vadd.f32 %v1445, %v1548
        %v1572 = vadd.f32 %v1446, %v1551
        %v1573 = vadd.f32 %v1447, %v1554
        %v1574 = vadd.f32 %v1448, %v1557
        %v1575 = vadd.f32 %v1449, %v1560
        %v1576 = vadd.f32 %v1450, %v1563
        %v1577 = vadd.f32 %v1451, %v1566
        %v1578 = vadd.f32 %v1452, %v1569
        %s1579 = scalar_lea.vmem %s5, 112
        %v1580 = vld [vmem:[%s1579] sm:$0xff]
        %v1581 = vld [vmem:[%s1579 + $0x8] sm:$0xff]
        %1582 = vmatpush.msra.mxu0 0.0
        %1583 = vmatpush.msra.mxu0 0.0
        %1584 = vmatpush.msra.mxu0 0.0
        %1585 = vmatpush.msra.mxu0 0.0
        %1586 = vmatpush.msra.mxu0 0.0
        %1587 = vmatpush.msra.mxu0 0.0
        %1588 = vmatpush.msra.mxu0 0.0
        %1589 = vmatpush.msra.mxu0 0.0
        %1590 = vmatpush.msra.mxu0 0.0
        %1591 = vmatpush.msra.mxu0 0.0
        %1592 = vmatpush.msra.mxu0 0.0
        %1593 = vmatpush.msra.mxu0 0.0
        %1594 = vmatpush.msra.mxu0 0.0
        %1595 = vmatpush.msra.mxu0 0.0
        %1596 = vmatpush.msra.mxu0 %v1581
        %1597 = vmatpush.msra.mxu0 %v1580
        %1598 = vmatmul.f32.gmra.mxu0 %v694
        %v1599 = vpop.f32.mrf.mxu0
        %v1600 = vadd.f32 0.0, %v1599
        %1601 = vmatmul.f32.gmra.mxu0 %v697
        %v1602 = vpop.f32.mrf.mxu0
        %v1603 = vadd.f32 0.0, %v1602
        %1604 = vmatmul.f32.gmra.mxu0 %v700
        %v1605 = vpop.f32.mrf.mxu0
        %v1606 = vadd.f32 0.0, %v1605
        %1607 = vmatmul.f32.gmra.mxu0 %v703
        %v1608 = vpop.f32.mrf.mxu0
        %v1609 = vadd.f32 0.0, %v1608
        %1610 = vmatmul.f32.gmra.mxu0 %v706
        %v1611 = vpop.f32.mrf.mxu0
        %v1612 = vadd.f32 0.0, %v1611
        %1613 = vmatmul.f32.gmra.mxu0 %v709
        %v1614 = vpop.f32.mrf.mxu0
        %v1615 = vadd.f32 0.0, %v1614
        %1616 = vmatmul.f32.gmra.mxu0 %v712
        %v1617 = vpop.f32.mrf.mxu0
        %v1618 = vadd.f32 0.0, %v1617
        %1619 = vmatmul.f32.gmra.mxu0 %v715
        %v1620 = vpop.f32.mrf.mxu0
        %v1621 = vadd.f32 0.0, %v1620
        %1622 = vdwg.mxu0
        %s1623 = scalar_lea.vmem %s4, 448
        %v1624 = vld [vmem:[%s1623] sm:$0xff]
        %v1625 = vld [vmem:[%s1623 + $0x8] sm:$0xff]
        %v1626 = vld [vmem:[%s1623 + $0x10] sm:$0xff]
        %v1627 = vld [vmem:[%s1623 + $0x18] sm:$0xff]
        %v1628 = vld [vmem:[%s1623 + $0x20] sm:$0xff]
        %v1629 = vld [vmem:[%s1623 + $0x28] sm:$0xff]
        %v1630 = vld [vmem:[%s1623 + $0x30] sm:$0xff]
        %v1631 = vld [vmem:[%s1623 + $0x38] sm:$0xff]
        %v1633 = vsel %vm592, %v1624, 0
        %v1636 = vsel %vm592, %v1625, 0
        %v1639 = vsel %vm592, %v1626, 0
        %v1642 = vsel %vm592, %v1627, 0
        %v1645 = vsel %vm592, %v1628, 0
        %v1648 = vsel %vm592, %v1629, 0
        %v1651 = vsel %vm592, %v1630, 0
        %v1654 = vsel %vm592, %v1631, 0
        %1656 = vmatpush.msra.mxu0 0.0
        %1657 = vmatpush.msra.mxu0 0.0
        %1658 = vmatpush.msra.mxu0 0.0
        %1659 = vmatpush.msra.mxu0 0.0
        %1660 = vmatpush.msra.mxu0 0.0
        %1661 = vmatpush.msra.mxu0 0.0
        %1662 = vmatpush.msra.mxu0 0.0
        %1663 = vmatpush.msra.mxu0 0.0
        %1664 = vmatpush.msra.mxu0 %v1621
        %1665 = vmatpush.msra.mxu0 %v1618
        %1666 = vmatpush.msra.mxu0 %v1615
        %1667 = vmatpush.msra.mxu0 %v1612
        %1668 = vmatpush.msra.mxu0 %v1609
        %1669 = vmatpush.msra.mxu0 %v1606
        %1670 = vmatpush.msra.mxu0 %v1603
        %1671 = vmatpush.msra.mxu0 %v1600
        %1672 = vmatmul.f32.gmra.mxu0 %v1633
        %v1673 = vpop.f32.mrf.mxu0
        %v1674 = vadd.f32 0.0, %v1673
        %1675 = vmatmul.f32.gmra.mxu0 %v1636
        %v1676 = vpop.f32.mrf.mxu0
        %v1677 = vadd.f32 0.0, %v1676
        %1678 = vmatmul.f32.gmra.mxu0 %v1639
        %v1679 = vpop.f32.mrf.mxu0
        %v1680 = vadd.f32 0.0, %v1679
        %1681 = vmatmul.f32.gmra.mxu0 %v1642
        %v1682 = vpop.f32.mrf.mxu0
        %v1683 = vadd.f32 0.0, %v1682
        %1684 = vmatmul.f32.gmra.mxu0 %v1645
        %v1685 = vpop.f32.mrf.mxu0
        %v1686 = vadd.f32 0.0, %v1685
        %1687 = vmatmul.f32.gmra.mxu0 %v1648
        %v1688 = vpop.f32.mrf.mxu0
        %v1689 = vadd.f32 0.0, %v1688
        %1690 = vmatmul.f32.gmra.mxu0 %v1651
        %v1691 = vpop.f32.mrf.mxu0
        %v1692 = vadd.f32 0.0, %v1691
        %1693 = vmatmul.f32.gmra.mxu0 %v1654
        %v1694 = vpop.f32.mrf.mxu0
        %v1695 = vadd.f32 0.0, %v1694
        %1696 = vdwg.mxu0
        %v1697 = vadd.f32 %v1571, %v1674
        %v1698 = vadd.f32 %v1572, %v1677
        %v1699 = vadd.f32 %v1573, %v1680
        %v1700 = vadd.f32 %v1574, %v1683
        %v1701 = vadd.f32 %v1575, %v1686
        %v1702 = vadd.f32 %v1576, %v1689
        %v1703 = vadd.f32 %v1577, %v1692
        %v1704 = vadd.f32 %v1578, %v1695
        %s1705 = scalar_lea.vmem %s5, 128
        %v1706 = vld [vmem:[%s1705] sm:$0xff]
        %v1707 = vld [vmem:[%s1705 + $0x8] sm:$0xff]
        %1708 = vmatpush.msra.mxu0 0.0
        %1709 = vmatpush.msra.mxu0 0.0
        %1710 = vmatpush.msra.mxu0 0.0
        %1711 = vmatpush.msra.mxu0 0.0
        %1712 = vmatpush.msra.mxu0 0.0
        %1713 = vmatpush.msra.mxu0 0.0
        %1714 = vmatpush.msra.mxu0 0.0
        %1715 = vmatpush.msra.mxu0 0.0
        %1716 = vmatpush.msra.mxu0 0.0
        %1717 = vmatpush.msra.mxu0 0.0
        %1718 = vmatpush.msra.mxu0 0.0
        %1719 = vmatpush.msra.mxu0 0.0
        %1720 = vmatpush.msra.mxu0 0.0
        %1721 = vmatpush.msra.mxu0 0.0
        %1722 = vmatpush.msra.mxu0 %v1707
        %1723 = vmatpush.msra.mxu0 %v1706
        %1724 = vmatmul.f32.gmra.mxu0 %v694
        %v1725 = vpop.f32.mrf.mxu0
        %v1726 = vadd.f32 0.0, %v1725
        %1727 = vmatmul.f32.gmra.mxu0 %v697
        %v1728 = vpop.f32.mrf.mxu0
        %v1729 = vadd.f32 0.0, %v1728
        %1730 = vmatmul.f32.gmra.mxu0 %v700
        %v1731 = vpop.f32.mrf.mxu0
        %v1732 = vadd.f32 0.0, %v1731
        %1733 = vmatmul.f32.gmra.mxu0 %v703
        %v1734 = vpop.f32.mrf.mxu0
        %v1735 = vadd.f32 0.0, %v1734
        %1736 = vmatmul.f32.gmra.mxu0 %v706
        %v1737 = vpop.f32.mrf.mxu0
        %v1738 = vadd.f32 0.0, %v1737
        %1739 = vmatmul.f32.gmra.mxu0 %v709
        %v1740 = vpop.f32.mrf.mxu0
        %v1741 = vadd.f32 0.0, %v1740
        %1742 = vmatmul.f32.gmra.mxu0 %v712
        %v1743 = vpop.f32.mrf.mxu0
        %v1744 = vadd.f32 0.0, %v1743
        %1745 = vmatmul.f32.gmra.mxu0 %v715
        %v1746 = vpop.f32.mrf.mxu0
        %v1747 = vadd.f32 0.0, %v1746
        %1748 = vdwg.mxu0
        %s1749 = scalar_lea.vmem %s4, 512
        %v1750 = vld [vmem:[%s1749] sm:$0xff]
        %v1751 = vld [vmem:[%s1749 + $0x8] sm:$0xff]
        %v1752 = vld [vmem:[%s1749 + $0x10] sm:$0xff]
        %v1753 = vld [vmem:[%s1749 + $0x18] sm:$0xff]
        %v1754 = vld [vmem:[%s1749 + $0x20] sm:$0xff]
        %v1755 = vld [vmem:[%s1749 + $0x28] sm:$0xff]
        %v1756 = vld [vmem:[%s1749 + $0x30] sm:$0xff]
        %v1757 = vld [vmem:[%s1749 + $0x38] sm:$0xff]
        %v1759 = vsel %vm592, %v1750, 0
        %v1762 = vsel %vm592, %v1751, 0
        %v1765 = vsel %vm592, %v1752, 0
        %v1768 = vsel %vm592, %v1753, 0
        %v1771 = vsel %vm592, %v1754, 0
        %v1774 = vsel %vm592, %v1755, 0
        %v1777 = vsel %vm592, %v1756, 0
        %v1780 = vsel %vm592, %v1757, 0
        %1782 = vmatpush.msra.mxu0 0.0
        %1783 = vmatpush.msra.mxu0 0.0
        %1784 = vmatpush.msra.mxu0 0.0
        %1785 = vmatpush.msra.mxu0 0.0
        %1786 = vmatpush.msra.mxu0 0.0
        %1787 = vmatpush.msra.mxu0 0.0
        %1788 = vmatpush.msra.mxu0 0.0
        %1789 = vmatpush.msra.mxu0 0.0
        %1790 = vmatpush.msra.mxu0 %v1747
        %1791 = vmatpush.msra.mxu0 %v1744
        %1792 = vmatpush.msra.mxu0 %v1741
        %1793 = vmatpush.msra.mxu0 %v1738
        %1794 = vmatpush.msra.mxu0 %v1735
        %1795 = vmatpush.msra.mxu0 %v1732
        %1796 = vmatpush.msra.mxu0 %v1729
        %1797 = vmatpush.msra.mxu0 %v1726
        %1798 = vmatmul.f32.gmra.mxu0 %v1759
        %v1799 = vpop.f32.mrf.mxu0
        %v1800 = vadd.f32 0.0, %v1799
        %1801 = vmatmul.f32.gmra.mxu0 %v1762
        %v1802 = vpop.f32.mrf.mxu0
        %v1803 = vadd.f32 0.0, %v1802
        %1804 = vmatmul.f32.gmra.mxu0 %v1765
        %v1805 = vpop.f32.mrf.mxu0
        %v1806 = vadd.f32 0.0, %v1805
        %1807 = vmatmul.f32.gmra.mxu0 %v1768
        %v1808 = vpop.f32.mrf.mxu0
        %v1809 = vadd.f32 0.0, %v1808
        %1810 = vmatmul.f32.gmra.mxu0 %v1771
        %v1811 = vpop.f32.mrf.mxu0
        %v1812 = vadd.f32 0.0, %v1811
        %1813 = vmatmul.f32.gmra.mxu0 %v1774
        %v1814 = vpop.f32.mrf.mxu0
        %v1815 = vadd.f32 0.0, %v1814
        %1816 = vmatmul.f32.gmra.mxu0 %v1777
        %v1817 = vpop.f32.mrf.mxu0
        %v1818 = vadd.f32 0.0, %v1817
        %1819 = vmatmul.f32.gmra.mxu0 %v1780
        %v1820 = vpop.f32.mrf.mxu0
        %v1821 = vadd.f32 0.0, %v1820
        %1822 = vdwg.mxu0
        %v1823 = vadd.f32 %v1697, %v1800
        %v1824 = vadd.f32 %v1698, %v1803
        %v1825 = vadd.f32 %v1699, %v1806
        %v1826 = vadd.f32 %v1700, %v1809
        %v1827 = vadd.f32 %v1701, %v1812
        %v1828 = vadd.f32 %v1702, %v1815
        %v1829 = vadd.f32 %v1703, %v1818
        %v1830 = vadd.f32 %v1704, %v1821
        %v1831 = vld [vmem:[%s6] sm:$0x1]
        %v1833 = vperm.slane %v1831, 0
        %v1835 = vmul.f32 %v1823, %v1833
        %v1836 = vmul.f32 %v1824, %v1833
        %v1837 = vmul.f32 %v1825, %v1833
        %v1838 = vmul.f32 %v1826, %v1833
        %v1839 = vmul.f32 %v1827, %v1833
        %v1840 = vmul.f32 %v1828, %v1833
        %v1841 = vmul.f32 %v1829, %v1833
        %v1842 = vmul.f32 %v1830, %v1833
        %v1843 = vld [vmem:[%s7] sm:$0x1]
        %v1845 = vperm.slane %v1843, 0
        %v1847 = vadd.f32 %v1835, %v1845
        %v1848 = vadd.f32 %v1836, %v1845
        %v1849 = vadd.f32 %v1837, %v1845
        %v1850 = vadd.f32 %v1838, %v1845
        %v1851 = vadd.f32 %v1839, %v1845
        %v1852 = vadd.f32 %v1840, %v1845
        %v1853 = vadd.f32 %v1841, %v1845
        %v1854 = vadd.f32 %v1842, %v1845
        %v1855 = vmax.f32 %v1847, 0.0
        %v1856 = vmax.f32 %v1848, 0.0
        %v1857 = vmax.f32 %v1849, 0.0
        %v1858 = vmax.f32 %v1850, 0.0
        %v1859 = vmax.f32 %v1851, 0.0
        %v1860 = vmax.f32 %v1852, 0.0
        %v1861 = vmax.f32 %v1853, 0.0
        %v1862 = vmax.f32 %v1854, 0.0
        %v1863 = vld [vmem:[%s8] sm:$0xff]
        %v1864 = vld [vmem:[%s8 + $0x8] sm:$0xff]
        %v1866 = vsel %vm692, %v1855, 0
        %v1869 = vsel %vm692, %v1856, 0
        %v1872 = vsel %vm692, %v1857, 0
        %v1875 = vsel %vm692, %v1858, 0
        %v1878 = vsel %vm692, %v1859, 0
        %v1881 = vsel %vm692, %v1860, 0
        %v1884 = vsel %vm692, %v1861, 0
        %v1887 = vsel %vm692, %v1862, 0
        %1889 = vmatpush.msra.mxu0 0.0
        %1890 = vmatpush.msra.mxu0 0.0
        %1891 = vmatpush.msra.mxu0 0.0
        %1892 = vmatpush.msra.mxu0 0.0
        %1893 = vmatpush.msra.mxu0 0.0
        %1894 = vmatpush.msra.mxu0 0.0
        %1895 = vmatpush.msra.mxu0 0.0
        %1896 = vmatpush.msra.mxu0 0.0
        %1897 = vmatpush.msra.mxu0 0.0
        %1898 = vmatpush.msra.mxu0 0.0
        %1899 = vmatpush.msra.mxu0 0.0
        %1900 = vmatpush.msra.mxu0 0.0
        %1901 = vmatpush.msra.mxu0 0.0
        %1902 = vmatpush.msra.mxu0 0.0
        %1903 = vmatpush.msra.mxu0 %v1864
        %1904 = vmatpush.msra.mxu0 %v1863
        %1905 = vmatmul.f32.gmra.mxu0 %v1866
        %v1906 = vpop.f32.mrf.mxu0
        %v1907 = vadd.f32 0.0, %v1906
        %1908 = vmatmul.f32.gmra.mxu0 %v1869
        %v1909 = vpop.f32.mrf.mxu0
        %v1910 = vadd.f32 0.0, %v1909
        %1911 = vmatmul.f32.gmra.mxu0 %v1872
        %v1912 = vpop.f32.mrf.mxu0
        %v1913 = vadd.f32 0.0, %v1912
        %1914 = vmatmul.f32.gmra.mxu0 %v1875
        %v1915 = vpop.f32.mrf.mxu0
        %v1916 = vadd.f32 0.0, %v1915
        %1917 = vmatmul.f32.gmra.mxu0 %v1878
        %v1918 = vpop.f32.mrf.mxu0
        %v1919 = vadd.f32 0.0, %v1918
        %1920 = vmatmul.f32.gmra.mxu0 %v1881
        %v1921 = vpop.f32.mrf.mxu0
        %v1922 = vadd.f32 0.0, %v1921
        %1923 = vmatmul.f32.gmra.mxu0 %v1884
        %v1924 = vpop.f32.mrf.mxu0
        %v1925 = vadd.f32 0.0, %v1924
        %1926 = vmatmul.f32.gmra.mxu0 %v1887
        %v1927 = vpop.f32.mrf.mxu0
        %v1928 = vadd.f32 0.0, %v1927
        %1929 = vdwg.mxu0
        %v1930 = vld [vmem:[%s9] sm:$0x1]
        %v1932 = vperm.slane %v1930, 0
        %v1934 = vmul.f32 %v1907, %v1932
        %v1935 = vmul.f32 %v1910, %v1932
        %v1936 = vmul.f32 %v1913, %v1932
        %v1937 = vmul.f32 %v1916, %v1932
        %v1938 = vmul.f32 %v1919, %v1932
        %v1939 = vmul.f32 %v1922, %v1932
        %v1940 = vmul.f32 %v1925, %v1932
        %v1941 = vmul.f32 %v1928, %v1932
        %v1942 = vld [vmem:[%s10] sm:$0x1]
        %v1944 = vperm.slane %v1942, 0
        %v1946 = vadd.f32 %v1934, %v1944
        %v1947 = vadd.f32 %v1935, %v1944
        %v1948 = vadd.f32 %v1936, %v1944
        %v1949 = vadd.f32 %v1937, %v1944
        %v1950 = vadd.f32 %v1938, %v1944
        %v1951 = vadd.f32 %v1939, %v1944
        %v1952 = vadd.f32 %v1940, %v1944
        %v1953 = vadd.f32 %v1941, %v1944
        %v1954 = vsel %vm592, %v1946, 0.0
        %v1955 = vsel %vm592, %v1947, 0.0
        %v1956 = vadd.f32 %v1954, %v1955
        %v1957 = vsel %vm592, %v1948, 0.0
        %v1958 = vadd.f32 %v1956, %v1957
        %v1959 = vsel %vm592, %v1949, 0.0
        %v1960 = vadd.f32 %v1958, %v1959
        %v1961 = vsel %vm592, %v1950, 0.0
        %v1962 = vadd.f32 %v1960, %v1961
        %v1963 = vsel %vm592, %v1951, 0.0
        %v1964 = vadd.f32 %v1962, %v1963
        %v1965 = vsel %vm592, %v1952, 0.0
        %v1966 = vadd.f32 %v1964, %v1965
        %v1967 = vsel %vm592, %v1953, 0.0
        %v1968 = vadd.f32 %v1966, %v1967
        %v1969 = vrot.slane %v1968, 4
        %v1970 = vadd.f32 %v1968, %v1969
        %v1971 = vrot.slane %v1970, 2
        %v1972 = vadd.f32 %v1970, %v1971
        %v1973 = vrot.slane %v1972, 1
        %v1974 = vadd.f32 %v1972, %v1973
        %v1975 = vrcp.pop 64.0
        %v1976 = vmul.f32 64.0, %v1975
        %v1977 = vsub.f32 1.0, %v1976
        %v1978 = vmul.f32 %v1975, %v1977
        %v1979 = vadd.f32 %v1975, %v1978
        %vm1980 = vweird.f32 %v1975
        %v1981 = vsel %vm1980, %v1975, %v1979
        %v1982 = vmul.f32 %v1974, %v1981
        %v1983 = vsel %vm592, %v1946, -inf
        %v1984 = vsel %vm592, %v1947, -inf
        %v1985 = vsel %vm592, %v1948, -inf
        %v1986 = vsel %vm592, %v1949, -inf
        %v1987 = vsel %vm592, %v1950, -inf
        %v1988 = vmax.f32 %v1983, %v1987
        %v1989 = vsel %vm592, %v1951, -inf
        %v1990 = vmax.f32 %v1984, %v1989
        %v1991 = vsel %vm592, %v1952, -inf
        %v1992 = vmax.f32 %v1985, %v1991
        %v1993 = vsel %vm592, %v1953, -inf
        %v1994 = vmax.f32 %v1986, %v1993
        %v1995 = vmax.f32 %v1988, %v1990
        %v1996 = vmax.f32 %v1992, %v1994
        %v1997 = vmax.f32 %v1995, %v1996
        %v1998 = vrot.slane %v1997, 4
        %v1999 = vmax.f32 %v1997, %v1998
        %v2000 = vrot.slane %v1999, 2
        %v2001 = vmax.f32 %v1999, %v2000
        %v2002 = vrot.slane %v2001, 1
        %v2003 = vmax.f32 %v2001, %v2002
        %vm2004 = vcmask 1040384
        %v2005 = vsel %vm2004, %v1982, %v2003
        %v2006 = vld [vmem:[%s11] sm:$0xff]
        %v2007 = vld [vmem:[%s11 + $0x8] sm:$0xff]
        %v2008 = vld [vmem:[%s11 + $0x10] sm:$0xff]
        %v2009 = vld [vmem:[%s11 + $0x18] sm:$0xff]
        %v2010 = vld [vmem:[%s11 + $0x20] sm:$0xff]
        %v2011 = vld [vmem:[%s11 + $0x28] sm:$0xff]
        %v2012 = vld [vmem:[%s11 + $0x30] sm:$0xff]
        %v2013 = vld [vmem:[%s11 + $0x38] sm:$0xff]
        %v2014 = vld [vmem:[%s12] sm:$0x1]
        %v2016 = vperm.slane %v2014, 0
        %v2019 = vsel %vm592, %v2005, 0
        %2021 = vmatpush.msra.mxu0 0.0
        %2022 = vmatpush.msra.mxu0 0.0
        %2023 = vmatpush.msra.mxu0 0.0
        %2024 = vmatpush.msra.mxu0 0.0
        %2025 = vmatpush.msra.mxu0 0.0
        %2026 = vmatpush.msra.mxu0 0.0
        %2027 = vmatpush.msra.mxu0 0.0
        %2028 = vmatpush.msra.mxu0 0.0
        %2029 = vmatpush.msra.mxu0 %v2013
        %2030 = vmatpush.msra.mxu0 %v2012
        %2031 = vmatpush.msra.mxu0 %v2011
        %2032 = vmatpush.msra.mxu0 %v2010
        %2033 = vmatpush.msra.mxu0 %v2009
        %2034 = vmatpush.msra.mxu0 %v2008
        %2035 = vmatpush.msra.mxu0 %v2007
        %2036 = vmatpush.msra.mxu0 %v2006
        %2037 = vmatmul.f32.gmra.mxu0 %v2019
        %v2038 = vpop.f32.mrf.mxu0
        %v2039 = vadd.f32 %v2016, %v2038
        %2040 = vdwg.mxu0
        %v2041 = vmax.f32 %v2039, 0.0
        %v2042 = vld [vmem:[%s13] sm:$0xf]
        %v2043 = vld [vmem:[%s14] sm:$0x1]
        %v2045 = vperm.slane %v2043, 0
        %vm2047 = vcmask 31744
        %v2049 = vsel %vm2047, %v2041, 0
        %vm2051 = vcmask 1043456
        %v2053 = vsel %vm2051, %v2042, 0
        %2055 = vmatpush.msra.mxu0 0.0
        %2056 = vmatpush.msra.mxu0 0.0
        %2057 = vmatpush.msra.mxu0 0.0
        %2058 = vmatpush.msra.mxu0 0.0
        %2059 = vmatpush.msra.mxu0 0.0
        %2060 = vmatpush.msra.mxu0 0.0
        %2061 = vmatpush.msra.mxu0 0.0
        %2062 = vmatpush.msra.mxu0 0.0
        %2063 = vmatpush.msra.mxu0 0.0
        %2064 = vmatpush.msra.mxu0 0.0
        %2065 = vmatpush.msra.mxu0 0.0
        %2066 = vmatpush.msra.mxu0 0.0
        %2067 = vmatpush.msra.mxu0 0.0
        %2068 = vmatpush.msra.mxu0 0.0
        %2069 = vmatpush.msra.mxu0 0.0
        %2070 = vmatpush.msra.mxu0 %v2053
        %2071 = vmatmul.f32.gmra.mxu0 %v2049
        %v2072 = vpop.f32.mrf.mxu0
        %v2073 = vadd.f32 %v2045, %v2072
        %2074 = vdwg.mxu0
        %vm2075 = vcmask 517120
        %v2076 = vsel %vm2075, %v2073, 0.0
        %v2077 = vrot.slane %v2076, 4
        %v2078 = vadd.f32 %v2076, %v2077
        %v2079 = vrot.slane %v2078, 2
        %v2080 = vadd.f32 %v2078, %v2079
        %v2081 = vrot.slane %v2080, 1
        %v2082 = vadd.f32 %v2080, %v2081
        %v2083 = vxor.u32 %v2082, 2147483648
        %v2084 = vmul.f32 %v2083, 1.442695
        %v2085 = vpow.pop %v2084
        %v2086 = vadd.f32 %v2085, 1.0
        %v2087 = vrcp.pop %v2086
        %v2088 = vmul.f32 %v2086, %v2087
        %v2089 = vsub.f32 1.0, %v2088
        %v2090 = vmul.f32 %v2087, %v2089
        %v2091 = vadd.f32 %v2087, %v2090
        %vm2092 = vweird.f32 %v2086
        %vm2093 = vweird.f32 %v2087
        %vm2094 = vmor %vm2092, %vm2093
        %v2095 = vsel %vm2094, %v2087, %v2091
        %v2096 = vand.u32 2147483647, %v2086
        %vm2097 = vcmp.eq.f32.partialorder %v2096, 8.507059e+37
        %v2098 = vand.u32 %v2086, 2147483648
        %v2099 = vor.u32 1.1754944e-38, %v2098
        %v2100 = vsel %vm2097, %v2099, %v2095
        %v2101 = vmul.f32 1.0, %v2100
        %v2102 = vmul.f32 %v1946, %v2101
        %v2103 = vmul.f32 %v1947, %v2101
        %v2104 = vmul.f32 %v1948, %v2101
        %v2105 = vmul.f32 %v1949, %v2101
        %v2106 = vmul.f32 %v1950, %v2101
        %v2107 = vmul.f32 %v1951, %v2101
        %v2108 = vmul.f32 %v1952, %v2101
        %v2109 = vmul.f32 %v1953, %v2101
        %v2110 = vsel %vm592, %v2102, 0.0
        %2111 = vadd.xlane.f32.xlu0 %v2110
        %v2112 = vpop.xlane.xlu0 %2111
        %v2113 = vsel %vm592, %v2103, 0.0
        %2114 = vadd.xlane.f32.xlu0 %v2113
        %v2115 = vpop.xlane.xlu0 %2114
        %v2116 = vsel %vm592, %v2104, 0.0
        %2117 = vadd.xlane.f32.xlu0 %v2116
        %v2118 = vpop.xlane.xlu0 %2117
        %v2119 = vsel %vm592, %v2105, 0.0
        %2120 = vadd.xlane.f32.xlu0 %v2119
        %v2121 = vpop.xlane.xlu0 %2120
        %v2122 = vsel %vm592, %v2106, 0.0
        %2123 = vadd.xlane.f32.xlu0 %v2122
        %v2124 = vpop.xlane.xlu0 %2123
        %v2125 = vsel %vm592, %v2107, 0.0
        %2126 = vadd.xlane.f32.xlu0 %v2125
        %v2127 = vpop.xlane.xlu0 %2126
        %v2128 = vsel %vm592, %v2108, 0.0
        %2129 = vadd.xlane.f32.xlu0 %v2128
        %v2130 = vpop.xlane.xlu0 %2129
        %v2131 = vsel %vm592, %v2109, 0.0
        %2132 = vadd.xlane.f32.xlu0 %v2131
        %v2133 = vpop.xlane.xlu0 %2132
        %v2134 = vmul.f32 %v2112, %v1981
        %v2135 = vmul.f32 %v2115, %v1981
        %v2136 = vmul.f32 %v2118, %v1981
        %v2137 = vmul.f32 %v2121, %v1981
        %v2138 = vmul.f32 %v2124, %v1981
        %v2139 = vmul.f32 %v2127, %v1981
        %v2140 = vmul.f32 %v2130, %v1981
        %v2141 = vmul.f32 %v2133, %v1981
        %v2142 = vsel %vm592, %v2102, -inf
        %2143 = vmax.xlane.f32.xlu0 %v2142
        %v2144 = vpop.xlane.xlu0 %2143
        %v2145 = vsel %vm592, %v2103, -inf
        %2146 = vmax.xlane.f32.xlu0 %v2145
        %v2147 = vpop.xlane.xlu0 %2146
        %v2148 = vsel %vm592, %v2104, -inf
        %2149 = vmax.xlane.f32.xlu0 %v2148
        %v2150 = vpop.xlane.xlu0 %2149
        %v2151 = vsel %vm592, %v2105, -inf
        %2152 = vmax.xlane.f32.xlu0 %v2151
        %v2153 = vpop.xlane.xlu0 %2152
        %v2154 = vsel %vm592, %v2106, -inf
        %2155 = vmax.xlane.f32.xlu0 %v2154
        %v2156 = vpop.xlane.xlu0 %2155
        %v2157 = vsel %vm592, %v2107, -inf
        %2158 = vmax.xlane.f32.xlu0 %v2157
        %v2159 = vpop.xlane.xlu0 %2158
        %v2160 = vsel %vm592, %v2108, -inf
        %2161 = vmax.xlane.f32.xlu0 %v2160
        %v2162 = vpop.xlane.xlu0 %2161
        %v2163 = vsel %vm592, %v2109, -inf
        %2164 = vmax.xlane.f32.xlu0 %v2163
        %v2165 = vpop.xlane.xlu0 %2164
        %v2166 = vld [vmem:[%s15] sm:$0xff]
        %v2167 = vld [vmem:[%s15 + $0x8] sm:$0xff]
        %v2168 = vld [vmem:[%s15 + $0x10] sm:$0xff]
        %v2169 = vld [vmem:[%s15 + $0x18] sm:$0xff]
        %v2170 = vld [vmem:[%s15 + $0x20] sm:$0xff]
        %v2171 = vld [vmem:[%s15 + $0x28] sm:$0xff]
        %v2172 = vld [vmem:[%s15 + $0x30] sm:$0xff]
        %v2173 = vld [vmem:[%s15 + $0x38] sm:$0xff]
        %v2174 = vld [vmem:[%s16] sm:$0xff]
        %v2175 = vld [vmem:[%s16 + $0x8] sm:$0xff]
        %v2176 = vld [vmem:[%s16 + $0x10] sm:$0xff]
        %v2177 = vld [vmem:[%s16 + $0x18] sm:$0xff]
        %v2178 = vld [vmem:[%s16 + $0x20] sm:$0xff]
        %v2179 = vld [vmem:[%s16 + $0x28] sm:$0xff]
        %v2180 = vld [vmem:[%s16 + $0x30] sm:$0xff]
        %v2181 = vld [vmem:[%s16 + $0x38] sm:$0xff]
        %v2183 = vsel %vm592, %v2174, 0
        %v2186 = vsel %vm592, %v2175, 0
        %v2189 = vsel %vm592, %v2176, 0
        %v2192 = vsel %vm592, %v2177, 0
        %v2195 = vsel %vm592, %v2178, 0
        %v2198 = vsel %vm592, %v2179, 0
        %v2201 = vsel %vm592, %v2180, 0
        %v2204 = vsel %vm592, %v2181, 0
        %2206 = vmatpush.msra.mxu0 0.0
        %2207 = vmatpush.msra.mxu0 0.0
        %2208 = vmatpush.msra.mxu0 0.0
        %2209 = vmatpush.msra.mxu0 0.0
        %2210 = vmatpush.msra.mxu0 0.0
        %2211 = vmatpush.msra.mxu0 0.0
        %2212 = vmatpush.msra.mxu0 0.0
        %2213 = vmatpush.msra.mxu0 0.0
        %2214 = vmatpush.msra.mxu0 %v2165
        %2215 = vmatpush.msra.mxu0 %v2162
        %2216 = vmatpush.msra.mxu0 %v2159
        %2217 = vmatpush.msra.mxu0 %v2156
        %2218 = vmatpush.msra.mxu0 %v2153
        %2219 = vmatpush.msra.mxu0 %v2150
        %2220 = vmatpush.msra.mxu0 %v2147
        %2221 = vmatpush.msra.mxu0 %v2144
        %2222 = vmatmul.f32.gmra.mxu0 %v2183
        %v2223 = vpop.f32.mrf.mxu0
        %v2224 = vadd.f32 0.0, %v2223
        %2225 = vmatmul.f32.gmra.mxu0 %v2186
        %v2226 = vpop.f32.mrf.mxu0
        %v2227 = vadd.f32 0.0, %v2226
        %2228 = vmatmul.f32.gmra.mxu0 %v2189
        %v2229 = vpop.f32.mrf.mxu0
        %v2230 = vadd.f32 0.0, %v2229
        %2231 = vmatmul.f32.gmra.mxu0 %v2192
        %v2232 = vpop.f32.mrf.mxu0
        %v2233 = vadd.f32 0.0, %v2232
        %2234 = vmatmul.f32.gmra.mxu0 %v2195
        %v2235 = vpop.f32.mrf.mxu0
        %v2236 = vadd.f32 0.0, %v2235
        %2237 = vmatmul.f32.gmra.mxu0 %v2198
        %v2238 = vpop.f32.mrf.mxu0
        %v2239 = vadd.f32 0.0, %v2238
        %2240 = vmatmul.f32.gmra.mxu0 %v2201
        %v2241 = vpop.f32.mrf.mxu0
        %v2242 = vadd.f32 0.0, %v2241
        %2243 = vmatmul.f32.gmra.mxu0 %v2204
        %v2244 = vpop.f32.mrf.mxu0
        %v2245 = vadd.f32 0.0, %v2244
        %2246 = vdwg.mxu0
        %v2248 = vsel %vm592, %v2166, 0
        %v2251 = vsel %vm592, %v2167, 0
        %v2254 = vsel %vm592, %v2168, 0
        %v2257 = vsel %vm592, %v2169, 0
        %v2260 = vsel %vm592, %v2170, 0
        %v2263 = vsel %vm592, %v2171, 0
        %v2266 = vsel %vm592, %v2172, 0
        %v2269 = vsel %vm592, %v2173, 0
        %2271 = vmatpush.msra.mxu0 0.0
        %2272 = vmatpush.msra.mxu0 0.0
        %2273 = vmatpush.msra.mxu0 0.0
        %2274 = vmatpush.msra.mxu0 0.0
        %2275 = vmatpush.msra.mxu0 0.0
        %2276 = vmatpush.msra.mxu0 0.0
        %2277 = vmatpush.msra.mxu0 0.0
        %2278 = vmatpush.msra.mxu0 0.0
        %2279 = vmatpush.msra.mxu0 %v2141
        %2280 = vmatpush.msra.mxu0 %v2140
        %2281 = vmatpush.msra.mxu0 %v2139
        %2282 = vmatpush.msra.mxu0 %v2138
        %2283 = vmatpush.msra.mxu0 %v2137
        %2284 = vmatpush.msra.mxu0 %v2136
        %2285 = vmatpush.msra.mxu0 %v2135
        %2286 = vmatpush.msra.mxu0 %v2134
        %2287 = vmatmul.f32.gmra.mxu0 %v2248
        %v2288 = vpop.f32.mrf.mxu0
        %v2289 = vadd.f32 %v2224, %v2288
        %2290 = vmatmul.f32.gmra.mxu0 %v2251
        %v2291 = vpop.f32.mrf.mxu0
        %v2292 = vadd.f32 %v2227, %v2291
        %2293 = vmatmul.f32.gmra.mxu0 %v2254
        %v2294 = vpop.f32.mrf.mxu0
        %v2295 = vadd.f32 %v2230, %v2294
        %2296 = vmatmul.f32.gmra.mxu0 %v2257
        %v2297 = vpop.f32.mrf.mxu0
        %v2298 = vadd.f32 %v2233, %v2297
        %2299 = vmatmul.f32.gmra.mxu0 %v2260
        %v2300 = vpop.f32.mrf.mxu0
        %v2301 = vadd.f32 %v2236, %v2300
        %2302 = vmatmul.f32.gmra.mxu0 %v2263
        %v2303 = vpop.f32.mrf.mxu0
        %v2304 = vadd.f32 %v2239, %v2303
        %2305 = vmatmul.f32.gmra.mxu0 %v2266
        %v2306 = vpop.f32.mrf.mxu0
        %v2307 = vadd.f32 %v2242, %v2306
        %2308 = vmatmul.f32.gmra.mxu0 %v2269
        %v2309 = vpop.f32.mrf.mxu0
        %v2310 = vadd.f32 %v2245, %v2309
        %2311 = vdwg.mxu0
        %v2312 = vld [vmem:[#allocation2] sm:$0x1]
        %v2314 = vperm.slane %v2312, 0
        %2315 = vset.pattern.permute.xlu0 0
        %2316 = vperm.xlu0 %2315, %v2314
        %v2317 = vpop.permute.xlu0 %2316
        %v2319 = vadd.f32 %v2289, %v2317
        %v2320 = vadd.f32 %v2292, %v2317
        %v2321 = vadd.f32 %v2295, %v2317
        %v2322 = vadd.f32 %v2298, %v2317
        %v2323 = vadd.f32 %v2301, %v2317
        %v2324 = vadd.f32 %v2304, %v2317
        %v2325 = vadd.f32 %v2307, %v2317
        %v2326 = vadd.f32 %v2310, %v2317
        %v2327 = vxor.u32 %v2319, 2147483648
        %v2328 = vxor.u32 %v2320, 2147483648
        %v2329 = vxor.u32 %v2321, 2147483648
        %v2330 = vxor.u32 %v2322, 2147483648
        %v2331 = vxor.u32 %v2323, 2147483648
        %v2332 = vxor.u32 %v2324, 2147483648
        %v2333 = vxor.u32 %v2325, 2147483648
        %v2334 = vxor.u32 %v2326, 2147483648
        %v2335 = vmul.f32 %v2327, 1.442695
        %v2336 = vpow.pop %v2335
        %v2337 = vmul.f32 %v2328, 1.442695
        %v2338 = vpow.pop %v2337
        %v2339 = vmul.f32 %v2329, 1.442695
        %v2340 = vpow.pop %v2339
        %v2341 = vmul.f32 %v2330, 1.442695
        %v2342 = vpow.pop %v2341
        %v2343 = vmul.f32 %v2331, 1.442695
        %v2344 = vpow.pop %v2343
        %v2345 = vmul.f32 %v2332, 1.442695
        %v2346 = vpow.pop %v2345
        %v2347 = vmul.f32 %v2333, 1.442695
        %v2348 = vpow.pop %v2347
        %v2349 = vmul.f32 %v2334, 1.442695
        %v2350 = vpow.pop %v2349
        %v2351 = vadd.f32 %v2336, 1.0
        %v2352 = vadd.f32 %v2338, 1.0
        %v2353 = vadd.f32 %v2340, 1.0
        %v2354 = vadd.f32 %v2342, 1.0
        %v2355 = vadd.f32 %v2344, 1.0
        %v2356 = vadd.f32 %v2346, 1.0
        %v2357 = vadd.f32 %v2348, 1.0
        %v2358 = vadd.f32 %v2350, 1.0
        %v2359 = vrcp.pop %v2351
        %v2360 = vmul.f32 %v2351, %v2359
        %v2361 = vsub.f32 1.0, %v2360
        %v2362 = vmul.f32 %v2359, %v2361
        %v2363 = vadd.f32 %v2359, %v2362
        %vm2364 = vweird.f32 %v2351
        %vm2365 = vweird.f32 %v2359
        %vm2366 = vmor %vm2364, %vm2365
        %v2367 = vsel %vm2366, %v2359, %v2363
        %v2368 = vand.u32 2147483647, %v2351
        %vm2369 = vcmp.eq.f32.partialorder %v2368, 8.507059e+37
        %v2370 = vand.u32 %v2351, 2147483648
        %v2371 = vor.u32 1.1754944e-38, %v2370
        %v2372 = vsel %vm2369, %v2371, %v2367
        %v2373 = vmul.f32 1.0, %v2372
        %v2374 = vrcp.pop %v2352
        %v2375 = vmul.f32 %v2352, %v2374
        %v2376 = vsub.f32 1.0, %v2375
        %v2377 = vmul.f32 %v2374, %v2376
        %v2378 = vadd.f32 %v2374, %v2377
        %vm2379 = vweird.f32 %v2352
        %vm2380 = vweird.f32 %v2374
        %vm2381 = vmor %vm2379, %vm2380
        %v2382 = vsel %vm2381, %v2374, %v2378
        %v2383 = vand.u32 2147483647, %v2352
        %vm2384 = vcmp.eq.f32.partialorder %v2383, 8.507059e+37
        %v2385 = vand.u32 %v2352, 2147483648
        %v2386 = vor.u32 1.1754944e-38, %v2385
        %v2387 = vsel %vm2384, %v2386, %v2382
        %v2388 = vmul.f32 1.0, %v2387
        %v2389 = vrcp.pop %v2353
        %v2390 = vmul.f32 %v2353, %v2389
        %v2391 = vsub.f32 1.0, %v2390
        %v2392 = vmul.f32 %v2389, %v2391
        %v2393 = vadd.f32 %v2389, %v2392
        %vm2394 = vweird.f32 %v2353
        %vm2395 = vweird.f32 %v2389
        %vm2396 = vmor %vm2394, %vm2395
        %v2397 = vsel %vm2396, %v2389, %v2393
        %v2398 = vand.u32 2147483647, %v2353
        %vm2399 = vcmp.eq.f32.partialorder %v2398, 8.507059e+37
        %v2400 = vand.u32 %v2353, 2147483648
        %v2401 = vor.u32 1.1754944e-38, %v2400
        %v2402 = vsel %vm2399, %v2401, %v2397
        %v2403 = vmul.f32 1.0, %v2402
        %v2404 = vrcp.pop %v2354
        %v2405 = vmul.f32 %v2354, %v2404
        %v2406 = vsub.f32 1.0, %v2405
        %v2407 = vmul.f32 %v2404, %v2406
        %v2408 = vadd.f32 %v2404, %v2407
        %vm2409 = vweird.f32 %v2354
        %vm2410 = vweird.f32 %v2404
        %vm2411 = vmor %vm2409, %vm2410
        %v2412 = vsel %vm2411, %v2404, %v2408
        %v2413 = vand.u32 2147483647, %v2354
        %vm2414 = vcmp.eq.f32.partialorder %v2413, 8.507059e+37
        %v2415 = vand.u32 %v2354, 2147483648
        %v2416 = vor.u32 1.1754944e-38, %v2415
        %v2417 = vsel %vm2414, %v2416, %v2412
        %v2418 = vmul.f32 1.0, %v2417
        %v2419 = vrcp.pop %v2355
        %v2420 = vmul.f32 %v2355, %v2419
        %v2421 = vsub.f32 1.0, %v2420
        %v2422 = vmul.f32 %v2419, %v2421
        %v2423 = vadd.f32 %v2419, %v2422
        %vm2424 = vweird.f32 %v2355
        %vm2425 = vweird.f32 %v2419
        %vm2426 = vmor %vm2424, %vm2425
        %v2427 = vsel %vm2426, %v2419, %v2423
        %v2428 = vand.u32 2147483647, %v2355
        %vm2429 = vcmp.eq.f32.partialorder %v2428, 8.507059e+37
        %v2430 = vand.u32 %v2355, 2147483648
        %v2431 = vor.u32 1.1754944e-38, %v2430
        %v2432 = vsel %vm2429, %v2431, %v2427
        %v2433 = vmul.f32 1.0, %v2432
        %v2434 = vrcp.pop %v2356
        %v2435 = vmul.f32 %v2356, %v2434
        %v2436 = vsub.f32 1.0, %v2435
        %v2437 = vmul.f32 %v2434, %v2436
        %v2438 = vadd.f32 %v2434, %v2437
        %vm2439 = vweird.f32 %v2356
        %vm2440 = vweird.f32 %v2434
        %vm2441 = vmor %vm2439, %vm2440
        %v2442 = vsel %vm2441, %v2434, %v2438
        %v2443 = vand.u32 2147483647, %v2356
        %vm2444 = vcmp.eq.f32.partialorder %v2443, 8.507059e+37
        %v2445 = vand.u32 %v2356, 2147483648
        %v2446 = vor.u32 1.1754944e-38, %v2445
        %v2447 = vsel %vm2444, %v2446, %v2442
        %v2448 = vmul.f32 1.0, %v2447
        %v2449 = vrcp.pop %v2357
        %v2450 = vmul.f32 %v2357, %v2449
        %v2451 = vsub.f32 1.0, %v2450
        %v2452 = vmul.f32 %v2449, %v2451
        %v2453 = vadd.f32 %v2449, %v2452
        %vm2454 = vweird.f32 %v2357
        %vm2455 = vweird.f32 %v2449
        %vm2456 = vmor %vm2454, %vm2455
        %v2457 = vsel %vm2456, %v2449, %v2453
        %v2458 = vand.u32 2147483647, %v2357
        %vm2459 = vcmp.eq.f32.partialorder %v2458, 8.507059e+37
        %v2460 = vand.u32 %v2357, 2147483648
        %v2461 = vor.u32 1.1754944e-38, %v2460
        %v2462 = vsel %vm2459, %v2461, %v2457
        %v2463 = vmul.f32 1.0, %v2462
        %v2464 = vrcp.pop %v2358
        %v2465 = vmul.f32 %v2358, %v2464
        %v2466 = vsub.f32 1.0, %v2465
        %v2467 = vmul.f32 %v2464, %v2466
        %v2468 = vadd.f32 %v2464, %v2467
        %vm2469 = vweird.f32 %v2358
        %vm2470 = vweird.f32 %v2464
        %vm2471 = vmor %vm2469, %vm2470
        %v2472 = vsel %vm2471, %v2464, %v2468
        %v2473 = vand.u32 2147483647, %v2358
        %vm2474 = vcmp.eq.f32.partialorder %v2473, 8.507059e+37
        %v2475 = vand.u32 %v2358, 2147483648
        %v2476 = vor.u32 1.1754944e-38, %v2475
        %v2477 = vsel %vm2474, %v2476, %v2472
        %v2478 = vmul.f32 1.0, %v2477
        %v2479 = vmul.f32 %v2102, %v2373
        %v2480 = vmul.f32 %v2103, %v2388
        %v2481 = vmul.f32 %v2104, %v2403
        %v2482 = vmul.f32 %v2105, %v2418
        %v2483 = vmul.f32 %v2106, %v2433
        %v2484 = vmul.f32 %v2107, %v2448
        %v2485 = vmul.f32 %v2108, %v2463
        %v2486 = vmul.f32 %v2109, %v2478
        %v2487 = vadd.f32 %v2479, %v576
        %v2488 = vadd.f32 %v2480, %v577
        %v2489 = vadd.f32 %v2481, %v578
        %v2490 = vadd.f32 %v2482, %v579
        %v2491 = vadd.f32 %v2483, %v580
        %v2492 = vadd.f32 %v2484, %v581
        %v2493 = vadd.f32 %v2485, %v582
        %v2494 = vadd.f32 %v2486, %v583
        %v2495 = vmax.f32 %v2487, 0.0
        %v2496 = vmax.f32 %v2488, 0.0
        %v2497 = vmax.f32 %v2489, 0.0
        %v2498 = vmax.f32 %v2490, 0.0
        %v2499 = vmax.f32 %v2491, 0.0
        %v2500 = vmax.f32 %v2492, 0.0
        %v2501 = vmax.f32 %v2493, 0.0
        %v2502 = vmax.f32 %v2494, 0.0
        %2503 = vst.msk [vmem:[%s570] sm:$0xff] %vm592, %v2495
        %2504 = vst.msk [vmem:[%s570 + $0x8] sm:$0xff] %vm592, %v2496
        %2505 = vst.msk [vmem:[%s570 + $0x10] sm:$0xff] %vm592, %v2497
        %2506 = vst.msk [vmem:[%s570 + $0x18] sm:$0xff] %vm592, %v2498
        %2507 = vst.msk [vmem:[%s570 + $0x20] sm:$0xff] %vm592, %v2499
        %2508 = vst.msk [vmem:[%s570 + $0x28] sm:$0xff] %vm592, %v2500
        %2509 = vst.msk [vmem:[%s570 + $0x30] sm:$0xff] %vm592, %v2501
        %2510 = vst.msk [vmem:[%s570 + $0x38] sm:$0xff] %vm592, %v2502
        %s2511 = sand.u32 %s425, 1
        %s2512 = scalar_lea.sflag [#allocation4], %s2511
        %s2513 = sand.u32 %s425, 1
        %s2514 = smul.addr %s2513, 64
        %s2515 = scalar_lea.vmem [#allocation3], %s2514
        // Predicated region
        $region93: #{bottleneck_forward.1} parent=91 // pred_check
          %p2516 = pneg %p435
        $region94: #{bottleneck_forward.1} parent=91 // pred_check_branch
          %2518 = sbr.rel (%p2516) target = $region96
        $region95: #{bottleneck_forward.1} parent=91 // pred_region
          %2520 = vsyncadd %s2512, 0
          %s2521 = smul.addr %s34, 8
          %s2522 = smul.addr %s2521, 8
          %s2523 = scalar_lea.hbm %s18, %s2522
          %s2524 = sshll.u32 %s2515, 4
          %s2525 = int_to_ptr.vmem [resolvable:$true] %s2524
          %s2526 = sshll.u32 %s2523, 4
          %s2527 = int_to_ptr.hbm [resolvable:$true] %s2526
          %2532 = dma.vmem_to_hbm [thread:$0]  %s2525, 1024, %s2527, %s2512, 128, 128, 8
        $region96: #{bottleneck_forward.1} parent=91 // pred_fallthru
          _
      $region92: #{bottleneck_forward.1} parent=5 // pred_fallthru
        _
      %p2533 = scmp.le.s32.totalorder 2, %s29
      // Predicated region
      $region97: #{bottleneck_forward.1} parent=5 // pred_check
        %p2534 = pneg %p2533
      $region98: #{bottleneck_forward.1} parent=5 // pred_check_branch
        %2536 = sbr.rel (%p2534) target = $region100
      $region99: #{bottleneck_forward.1} parent=5 // pred_region
        %s2537 = ssub.s32 %s29, 2
        // Predicated region
        $region101: #{bottleneck_forward.1} parent=99 // pred_check
          %p2538 = pneg %p441
        $region102: #{bottleneck_forward.1} parent=99 // pred_check_branch
          %2540 = sbr.rel (%p2538) target = $region104
        $region103: #{bottleneck_forward.1} parent=99 // pred_region
          %s2541 = sand.u32 %s426, 1
          %s2542 = scalar_lea.sflag [#allocation4], %s2541
          %s2543 = sand.u32 %s426, 1
          %s2544 = smul.addr %s2543, 64
          %s2545 = scalar_lea.vmem [#allocation3], %s2544
          %2547 = dma.done %s2542, 1024
        $region104: #{bottleneck_forward.1} parent=99 // pred_fallthru
          _
      $region100: #{bottleneck_forward.1} parent=5 // pred_fallthru
        _
    $region6: #{bottleneck_forward.1} parent=1 // loop_footer
      %s33 = sadd.s32 1, %s29
    $region7: #{bottleneck_forward.1} parent=1 // loop_footer_branch
      %28 = sbr.rel target = $region3
    $region8: #{bottleneck_forward.1} parent=1 // loop_exit
      _
    %2548 = vsyncpa [#allocation4], 1
    %s2549 = scalar_lea.sflag [#allocation4], 1
    %2550 = vsyncpa %s2549, 1

</llo_original>
